<compile_context>
chip_gen: v7x
topology: tpu7x:2x2x1
jax: 0.10.0
libtpu: 0.0.40
codegen_flags: <defaults>
</compile_context>

<pallas_src>
import functools

import jax
import jax.numpy as jnp
from jax import lax
from jax.experimental import pallas as pl
from jax.experimental.pallas import tpu as pltpu

_LANE = 128


def _ds_conv_kernel(x_hbm, dw_ref, pw_ref, bias_ref, out_ref, xbuf, sem, *,
                    stride, residual, n_inner, rc, mxu_dtype):
    # x_hbm:   (N, H+2, W+2, Cpad)    zero-padded input, resident in HBM
    # dw_ref:  (3, 3, Cpad)           depthwise 3x3 filters (VMEM, f32)
    # pw_ref:  (Cpad, Coutp)          pointwise weights * BN scale (VMEM, bf16)
    # bias_ref:(1, Coutp)             folded BN bias (f32)
    # out_ref: (TH, W_out, Coutp)     output row tile (batch dim squeezed)
    # xbuf:    (2, TH_in, W+2, Cpad)  double-buffered input strip (VMEM)
    # sem:     (2,) DMA semaphores
    c = pl.program_id(0)        # megacore split of the batch range
    bb = pl.program_id(1)       # batch index within this core's slice
    i = pl.program_id(2)        # output-row tile index
    n_tiles = pl.num_programs(2)

    th, w_out, coutp = out_ref.shape
    th_in = xbuf.shape[1]
    cpad = xbuf.shape[3]
    rows_per_tile = th * stride
    n_chunks = th // rc

    b = c * n_inner + bb
    step = bb * n_tiles + i          # per-core linear step (slot parity)
    slot = step % 2

    def dma(batch, row_tile, slt):
        return pltpu.make_async_copy(
            x_hbm.at[batch, pl.ds(row_tile * rows_per_tile, th_in)],
            xbuf.at[slt], sem.at[slt])

    # Prime the pipeline at the first step of each parallel (per-core) slice.
    @pl.when(jnp.logical_and(bb == 0, i == 0))
    def _():
        dma(b, 0, slot).start()

    # Wait for this step's strip (identical descriptor to the one started).
    dma(b, i, slot).wait()

    # Prefetch the next row tile of this batch, or the first strip of the next
    # batch element in this core's slice (removes the per-batch DMA bubble).
    @pl.when(i + 1 < n_tiles)
    def _():
        dma(b, i + 1, 1 - slot).start()

    @pl.when(jnp.logical_and(i + 1 == n_tiles, bb + 1 < n_inner))
    def _():
        dma(b + 1, 0, 1 - slot).start()

    # Hoist the 9 depthwise tap vectors and the bias out of all loops.
    taps = [dw_ref[kh, kw, :].astype(jnp.float32)
            for kh in range(3) for kw in range(3)]
    bias = bias_ref[0, :]

    def compute_chunk(r0):
        # ---- depthwise 3x3: register-resident f32 accumulation (no per-tap
        # VMEM load/store round-trips; one store per chunk at the end) ----
        acc = jnp.zeros((rc, w_out, cpad), jnp.float32)
        for t in range(9):
            kh, kw = divmod(t, 3)
            if stride == 1:
                win = xbuf[slot, pl.ds(r0 + kh, rc), pl.ds(kw, w_out), :]
            else:
                win = xbuf[slot, pl.ds(r0 * stride + kh, rc, stride),
                           pl.ds(kw, w_out, stride), :]
            acc = acc + win.astype(jnp.float32) * taps[t]

        # ---- pointwise 1x1 == channel matmul on the MXU (bf16 operands, f32
        # accumulation; BN scale pre-folded into pw on the host). The reshape
        # merges (rc, w_out); it is relayout-free when w_out % 8 == 0. ----
        lhs = acc.reshape(rc * w_out, cpad)
        if mxu_dtype is not None:
            lhs = lhs.astype(mxu_dtype)
        out2d = jnp.dot(lhs, pw_ref[...], preferred_element_type=jnp.float32)
        out2d = out2d + bias
        out = out2d.reshape(rc, w_out, coutp)

        # ---- residual from the strip's center slice (stride==1, Cin==Cout) --
        if residual:
            out = out + xbuf[slot, pl.ds(1 + r0, rc),
                             pl.ds(1, w_out), :].astype(jnp.float32)

        # ---- ReLU + single lane-dense store of the finished chunk ----
        out_ref[pl.ds(r0, rc)] = jnp.maximum(out, 0.0).astype(out_ref.dtype)

    if n_chunks == 1:
        compute_chunk(0)
    elif stride == 1:
        def body(r, carry):
            compute_chunk(pl.multiple_of(r * rc, rc))
            return carry
        lax.fori_loop(0, n_chunks, body, 0)
    else:
        # TODO(synk): stride>1 would be cheaper with a one-shot strip subsample
        # instead of 9 strided reads per chunk; kept simple (path unused here).
        for r in range(n_chunks):
            compute_chunk(r * rc)


def depthwise_separable_conv(x, dw_w, pw_w, gamma, beta, mean, var, *,
                             stride=1, residual=True, eps=1e-5,
                             mxu_dtype=jnp.bfloat16,
                             vmem_budget_bytes=24 * 1024 * 1024,
                             input_format="NCHW"):
    """Fused depthwise-separable conv block (eval-mode BN).

    x: (N, Cin, H, W) if input_format == "NCHW", else (N, H, W, Cin).
    dw_w: (3, 3, Cin); pw_w: (Cin, Cout); gamma/beta/mean/var: (Cout,).
    """
    if input_format == "NCHW":
        x = jnp.transpose(x, (0, 2, 3, 1))          # NHWC: channels on lanes
    n, h, w, cin = x.shape
    cout = pw_w.shape[1]
    residual = bool(residual and (cin == cout) and (stride == 1))

    cpad = -(-cin // _LANE) * _LANE
    coutp = -(-cout // _LANE) * _LANE

    # TODO(synk): for cin << 128 a lane-partial DMA + in-kernel zeroing of the
    # pad lanes would skip this channel pad; XLA's tiled HBM layout already pads
    # the minor dim, so the practical win is limited and we keep the safe path.
    xpad = jnp.pad(x, ((0, 0), (1, 1), (1, 1), (0, cpad - cin)))
    hp, wp = h + 2, w + 2
    h_out = (h + 2 - 3) // stride + 1
    w_out = (w + 2 - 3) // stride + 1

    # Fold eval-mode BN into the pointwise weights; pre-cast to the MXU dtype
    # on the host so nothing gets re-cast per grid step inside the kernel.
    pw_dtype = jnp.float32 if mxu_dtype is None else mxu_dtype
    scale = (gamma / jnp.sqrt(var + eps)).astype(jnp.float32)
    bias = (beta - mean * scale).astype(jnp.float32)
    pw_folded = jnp.pad(pw_w.astype(jnp.float32) * scale[None, :],
                        ((0, cpad - cin), (0, coutp - cout))).astype(pw_dtype)
    dw_padded = jnp.pad(dw_w.astype(jnp.float32),
                        ((0, 0), (0, 0), (0, cpad - cin)))
    bias_padded = jnp.pad(bias, (0, coutp - cout)).reshape(1, coutp)

    in_isz = xpad.dtype.itemsize
    out_isz = in_isz
    pw_isz = jnp.dtype(pw_dtype).itemsize

    # ---- row-tile selection from a VMEM budget (default 24 MiB of scratch/IO:
    # fits v7x's 64 MiB physical VMEM with headroom; v5e/v6e have 128 MiB) ----
    weight_bytes = 2 * (9 * cpad * 4 + cpad * coutp * pw_isz + coutp * 4)
    per_row = 2 * stride * wp * cpad * in_isz + 2 * w_out * coutp * out_isz
    fixed = 2 * max(3 - stride, 0) * wp * cpad * in_isz
    avail = max(vmem_budget_bytes - fixed - weight_bytes, per_row)
    th = int(min(h_out, max(1, avail // per_row)))
    # Register-chunk rows: keep the f32 accumulator at <= ~16 vregs (64 KiB).
    rc_max = max(1, (64 * 1024) // (w_out * cpad * 4))
    if stride > 1:                        # static-unroll path: bound chunk count
        th = min(th, rc_max * 8)
    while h_out % th:
        th -= 1
    rc = 1
    for d in range(1, th + 1):
        if th % d == 0 and d <= rc_max:
            rc = d
    th_in = (th - 1) * stride + 3
    n_tiles = h_out // th

    # Leading "parallel" axis so v7x megacore gets both TensorCores when N is
    # even; the sequential prefetch chain lives on the trailing arbitrary axes.
    n_outer = 2 if (n >= 2 and n % 2 == 0) else 1
    n_inner = n // n_outer

    xbuf_bytes = 2 * th_in * wp * cpad * in_isz
    outbuf_bytes = 2 * th * w_out * coutp * out_isz
    vmem_limit = int((xbuf_bytes + outbuf_bytes + weight_bytes) * 1.3) + (2 << 20)
    vmem_limit = min(max(vmem_limit, 16 << 20), 98 << 20)

    flops = (2 * 9 * n * h_out * w_out * cpad
             + 2 * n * h_out * w_out * cpad * coutp)
    bytes_accessed = (n * n_tiles * th_in * wp * cpad * in_isz
                      + n * h_out * w_out * coutp * out_isz
                      + 9 * cpad * 4 + cpad * coutp * pw_isz + coutp * 4)

    kernel = functools.partial(_ds_conv_kernel, stride=stride,
                               residual=residual, n_inner=n_inner, rc=rc,
                               mxu_dtype=mxu_dtype)

    out_padded = pl.pallas_call(
        kernel,
        out_shape=jax.ShapeDtypeStruct((n, h_out, w_out, coutp), x.dtype),
        grid_spec=pltpu.PrefetchScalarGridSpec(
            num_scalar_prefetch=0,
            grid=(n_outer, n_inner, n_tiles),
            in_specs=[
                pl.BlockSpec(memory_space=pl.ANY),                       # x HBM
                pl.BlockSpec((3, 3, cpad), lambda c, bb, i: (0, 0, 0)),  # dw
                pl.BlockSpec((cpad, coutp), lambda c, bb, i: (0, 0)),    # pw
                pl.BlockSpec((1, coutp), lambda c, bb, i: (0, 0)),       # bias
            ],
            out_specs=pl.BlockSpec(
                (None, th, w_out, coutp),
                lambda c, bb, i: (c * n_inner + bb, i, 0, 0)),
            scratch_shapes=[
                pltpu.VMEM((2, th_in, wp, cpad), x.dtype),   # input strip x2
                pltpu.SemaphoreType.DMA((2,)),
            ]),
        compiler_params=pltpu.CompilerParams(
            dimension_semantics=("parallel", "arbitrary", "arbitrary"),
            vmem_limit_bytes=vmem_limit),
        cost_estimate=pl.CostEstimate(flops=flops, transcendentals=0,
                                      bytes_accessed=int(bytes_accessed)),
    )(xpad, dw_padded, pw_folded, bias_padded)

    out = out_padded[..., :cout]
    if input_format == "NCHW":
        out = jnp.transpose(out, (0, 3, 1, 2))
    return out


def _reference(x, dw_w, pw_w, gamma, beta, mean, var, stride, residual,
               eps=1e-5):
    cin = x.shape[1]
    cout = pw_w.shape[1]
    residual = bool(residual and (cin == cout) and (stride == 1))
    dw_oihw = jnp.transpose(dw_w, (2, 0, 1))[:, None, :, :]        # (Cin,1,3,3)
    out = lax.conv_general_dilated(
        x, dw_oihw, (stride, stride), ((1, 1), (1, 1)),
        feature_group_count=cin,
        dimension_numbers=('NCHW', 'OIHW', 'NCHW'))
    pw_oihw = jnp.transpose(pw_w, (1, 0))[:, :, None, None]        # (Cout,Cin,1,1)
    out = lax.conv_general_dilated(
        out, pw_oihw, (1, 1), ((0, 0), (0, 0)),
        dimension_numbers=('NCHW', 'OIHW', 'NCHW'))
    out = ((out - mean[None, :, None, None])
           / jnp.sqrt(var + eps)[None, :, None, None]
           * gamma[None, :, None, None] + beta[None, :, None, None])
    if residual:
        out = out + x
    return jnp.maximum(out, 0.0)


if __name__ == "__main__":
    key = jax.random.PRNGKey(0)
    k_x, k_dw, k_pw, k_g, k_b, k_m, k_v = jax.random.split(key, 7)

    N, C_IN, C_OUT, H, W = 2, 4, 4, 16, 16
    stride = 1

    x = jax.random.normal(k_x, (N, C_IN, H, W), dtype=jnp.float32)
    dw_w = jax.random.normal(k_dw, (3, 3, C_IN), dtype=jnp.float32) * 0.3
    pw_w = jax.random.normal(k_pw, (C_IN, C_OUT), dtype=jnp.float32) * 0.3
    gamma = jax.random.normal(k_g, (C_OUT,), dtype=jnp.float32) * 0.1 + 1.0
    beta = jax.random.normal(k_b, (C_OUT,), dtype=jnp.float32) * 0.1
    r_mean = jax.random.normal(k_m, (C_OUT,), dtype=jnp.float32) * 0.1
    r_var = jnp.abs(jax.random.normal(k_v, (C_OUT,), dtype=jnp.float32)) * 0.1 + 1.0

    out = depthwise_separable_conv(x, dw_w, pw_w, gamma, beta, r_mean, r_var,
                                   stride=stride, residual=True)
    out = jax.block_until_ready(out)

    ref = _reference(x, dw_w, pw_w, gamma, beta, r_mean, r_var,
                     stride=stride, residual=True)
    assert out.shape == ref.shape, (out.shape, ref.shape)
    # Default path runs the pointwise matmul in bf16 on the MXU (f32 accum),
    # so compare with a bf16-appropriate tolerance.
    assert jnp.allclose(out, ref, atol=5e-2, rtol=5e-2), \
        float(jnp.max(jnp.abs(out - ref)))
    print("KERNEL_OK")
</pallas_src>

<mosaic_0001>
module attributes {stable_mosaic.version = 11 : i64} {
  func.func @_ds_conv_kernel(%arg0: i32, %arg1: i32, %arg2: i32, %arg3: memref<2x18x18x128xf32, #tpu.memory_space<any>>, %arg4: memref<3x3x128xf32, #tpu.memory_space<vmem>>, %arg5: memref<128x128xbf16, #tpu.memory_space<vmem>>, %arg6: memref<1x128xf32, #tpu.memory_space<vmem>>, %arg7: memref<1x16x16x128xf32, #tpu.memory_space<vmem>>, %arg8: memref<2x18x18x128xf32, #tpu.memory_space<vmem>>, %arg9: memref<2x!tpu.dma_semaphore, #tpu.memory_space<semaphore_mem>>) attributes {dimension_semantics = [#tpu.dimension_semantics<parallel>, #tpu.dimension_semantics<arbitrary>, #tpu.dimension_semantics<arbitrary>], iteration_bounds = array<i64: 2, 1, 1>, scalar_prefetch = 0 : i64, scratch_operands = 2 : i64, tpu.core_type = #tpu.core_type<tc>, window_params = [{}, {pipeline_mode = #tpu.pipeline_mode<synchronous>, transform_indices = @transform_1, window_bounds = array<i64: 3, 3, 128>}, {pipeline_mode = #tpu.pipeline_mode<synchronous>, transform_indices = @transform_2, window_bounds = array<i64: 128, 128>}, {pipeline_mode = #tpu.pipeline_mode<synchronous>, transform_indices = @transform_3, window_bounds = array<i64: 1, 128>}, {transform_indices = @transform_4, window_bounds = array<i64: 1, 16, 16, 128>}]} {
    %c1_i32 = arith.constant 1 : i32
    %0 = arith.muli %arg0, %c1_i32 : i32
    %1 = arith.addi %0, %arg1 : i32
    %c1_i32_0 = arith.constant 1 : i32
    %2 = arith.muli %arg1, %c1_i32_0 : i32
    %3 = arith.addi %2, %arg2 : i32
    %c2_i32 = arith.constant 2 : i32
    %c0_i32 = arith.constant 0 : i32
    %4 = arith.cmpi eq, %c2_i32, %c0_i32 : i32
    %c1_i32_1 = arith.constant 1 : i32
    %5 = arith.select %4, %c1_i32_1, %c2_i32 : i32
    %6 = arith.remsi %3, %5 : i32
    %c0_i32_2 = arith.constant 0 : i32
    %7 = arith.cmpi ne, %6, %c0_i32_2 : i32
    %c0_i32_3 = arith.constant 0 : i32
    %8 = arith.cmpi slt, %6, %c0_i32_3 : i32
    %c0_i32_4 = arith.constant 0 : i32
    %9 = arith.cmpi slt, %5, %c0_i32_4 : i32
    %10 = arith.xori %8, %9 : i1
    %11 = arith.andi %10, %7 : i1
    %12 = arith.addi %6, %5 : i32
    %13 = arith.select %11, %12, %6 : i32
    %c0_i32_5 = arith.constant 0 : i32
    %14 = arith.cmpi eq, %arg1, %c0_i32_5 : i32
    %c0_i32_6 = arith.constant 0 : i32
    %15 = arith.cmpi eq, %arg2, %c0_i32_6 : i32
    %16 = arith.andi %14, %15 : i1
    %17 = arith.extui %16 : i1 to i32
    %c0_i32_7 = arith.constant 0 : i32
    %18 = arith.cmpi ne, %17, %c0_i32_7 : i32
    scf.if %18 {
      %c0_i32_51 = arith.constant 0 : i32
      %c0_i32_52 = arith.constant 0 : i32
      %c0_i32_53 = arith.constant 0 : i32
      %58 = tpu.memref_slice %arg3[%1, %c0_i32_51, %c0_i32_52, %c0_i32_53] : memref<2x18x18x128xf32, #tpu.memory_space<any>> -> memref<1x18x18x128xf32, #tpu.memory_space<any>>
      %59 = tpu.memref_squeeze %58 : memref<1x18x18x128xf32, #tpu.memory_space<any>> -> memref<18x18x128xf32, #tpu.memory_space<any>>
      %c0_i32_54 = arith.constant 0 : i32
      %c0_i32_55 = arith.constant 0 : i32
      %c0_i32_56 = arith.constant 0 : i32
      %60 = tpu.memref_slice %arg8[%13, %c0_i32_54, %c0_i32_55, %c0_i32_56] : memref<2x18x18x128xf32, #tpu.memory_space<vmem>> -> memref<1x18x18x128xf32, #tpu.memory_space<vmem>>
      %61 = tpu.memref_squeeze %60 : memref<1x18x18x128xf32, #tpu.memory_space<vmem>> -> memref<18x18x128xf32, #tpu.memory_space<vmem>>
      %62 = tpu.memref_slice %arg9[%13] : memref<2x!tpu.dma_semaphore, #tpu.memory_space<semaphore_mem>> -> memref<1x!tpu.dma_semaphore, #tpu.memory_space<semaphore_mem>>
      %63 = tpu.memref_squeeze %62 : memref<1x!tpu.dma_semaphore, #tpu.memory_space<semaphore_mem>> -> memref<!tpu.dma_semaphore, #tpu.memory_space<semaphore_mem>>
      tpu.enqueue_dma source(%59 : memref<18x18x128xf32, #tpu.memory_space<any>>) target(%61 : memref<18x18x128xf32, #tpu.memory_space<vmem>>) target_semaphore(%63 : memref<!tpu.dma_semaphore, #tpu.memory_space<semaphore_mem>>)
    } else {
    }
    %c16_i32 = arith.constant 16 : i32
    %19 = arith.muli %arg2, %c16_i32 : i32
    %c0_i32_8 = arith.constant 0 : i32
    %c0_i32_9 = arith.constant 0 : i32
    %20 = tpu.memref_slice %arg3[%1, %19, %c0_i32_8, %c0_i32_9] : memref<2x18x18x128xf32, #tpu.memory_space<any>> -> memref<1x18x18x128xf32, #tpu.memory_space<any>>
    %21 = tpu.memref_squeeze %20 : memref<1x18x18x128xf32, #tpu.memory_space<any>> -> memref<18x18x128xf32, #tpu.memory_space<any>>
    %c0_i32_10 = arith.constant 0 : i32
    %c0_i32_11 = arith.constant 0 : i32
    %c0_i32_12 = arith.constant 0 : i32
    %22 = tpu.memref_slice %arg8[%13, %c0_i32_10, %c0_i32_11, %c0_i32_12] : memref<2x18x18x128xf32, #tpu.memory_space<vmem>> -> memref<1x18x18x128xf32, #tpu.memory_space<vmem>>
    %23 = tpu.memref_squeeze %22 : memref<1x18x18x128xf32, #tpu.memory_space<vmem>> -> memref<18x18x128xf32, #tpu.memory_space<vmem>>
    %24 = tpu.memref_slice %arg9[%13] : memref<2x!tpu.dma_semaphore, #tpu.memory_space<semaphore_mem>> -> memref<1x!tpu.dma_semaphore, #tpu.memory_space<semaphore_mem>>
    %25 = tpu.memref_squeeze %24 : memref<1x!tpu.dma_semaphore, #tpu.memory_space<semaphore_mem>> -> memref<!tpu.dma_semaphore, #tpu.memory_space<semaphore_mem>>
    tpu.wait_dma2 semaphore(%25 : memref<!tpu.dma_semaphore, #tpu.memory_space<semaphore_mem>>) src(%21 : memref<18x18x128xf32, #tpu.memory_space<any>>) dst(%23 : memref<18x18x128xf32, #tpu.memory_space<vmem>>)
    %c1_i32_13 = arith.constant 1 : i32
    %26 = arith.addi %arg2, %c1_i32_13 : i32
    %c1_i32_14 = arith.constant 1 : i32
    %27 = arith.cmpi slt, %26, %c1_i32_14 : i32
    %28 = arith.extui %27 : i1 to i32
    %c0_i32_15 = arith.constant 0 : i32
    %29 = arith.cmpi ne, %28, %c0_i32_15 : i32
    scf.if %29 {
      %c1_i32_51 = arith.constant 1 : i32
      %58 = arith.addi %arg2, %c1_i32_51 : i32
      %c1_i32_52 = arith.constant 1 : i32
      %59 = arith.subi %c1_i32_52, %13 : i32
      %c16_i32_53 = arith.constant 16 : i32
      %60 = arith.muli %58, %c16_i32_53 : i32
      %c0_i32_54 = arith.constant 0 : i32
      %c0_i32_55 = arith.constant 0 : i32
      %61 = tpu.memref_slice %arg3[%1, %60, %c0_i32_54, %c0_i32_55] : memref<2x18x18x128xf32, #tpu.memory_space<any>> -> memref<1x18x18x128xf32, #tpu.memory_space<any>>
      %62 = tpu.memref_squeeze %61 : memref<1x18x18x128xf32, #tpu.memory_space<any>> -> memref<18x18x128xf32, #tpu.memory_space<any>>
      %c0_i32_56 = arith.constant 0 : i32
      %c0_i32_57 = arith.constant 0 : i32
      %c0_i32_58 = arith.constant 0 : i32
      %63 = tpu.memref_slice %arg8[%59, %c0_i32_56, %c0_i32_57, %c0_i32_58] : memref<2x18x18x128xf32, #tpu.memory_space<vmem>> -> memref<1x18x18x128xf32, #tpu.memory_space<vmem>>
      %64 = tpu.memref_squeeze %63 : memref<1x18x18x128xf32, #tpu.memory_space<vmem>> -> memref<18x18x128xf32, #tpu.memory_space<vmem>>
      %65 = tpu.memref_slice %arg9[%59] : memref<2x!tpu.dma_semaphore, #tpu.memory_space<semaphore_mem>> -> memref<1x!tpu.dma_semaphore, #tpu.memory_space<semaphore_mem>>
      %66 = tpu.memref_squeeze %65 : memref<1x!tpu.dma_semaphore, #tpu.memory_space<semaphore_mem>> -> memref<!tpu.dma_semaphore, #tpu.memory_space<semaphore_mem>>
      tpu.enqueue_dma source(%62 : memref<18x18x128xf32, #tpu.memory_space<any>>) target(%64 : memref<18x18x128xf32, #tpu.memory_space<vmem>>) target_semaphore(%66 : memref<!tpu.dma_semaphore, #tpu.memory_space<semaphore_mem>>)
    } else {
    }
    %c1_i32_16 = arith.constant 1 : i32
    %30 = arith.addi %arg2, %c1_i32_16 : i32
    %c1_i32_17 = arith.constant 1 : i32
    %31 = arith.cmpi eq, %30, %c1_i32_17 : i32
    %c1_i32_18 = arith.constant 1 : i32
    %32 = arith.addi %arg1, %c1_i32_18 : i32
    %c1_i32_19 = arith.constant 1 : i32
    %33 = arith.cmpi slt, %32, %c1_i32_19 : i32
    %34 = arith.andi %31, %33 : i1
    %35 = arith.extui %34 : i1 to i32
    %c0_i32_20 = arith.constant 0 : i32
    %36 = arith.cmpi ne, %35, %c0_i32_20 : i32
    scf.if %36 {
      %c1_i32_51 = arith.constant 1 : i32
      %58 = arith.addi %1, %c1_i32_51 : i32
      %c1_i32_52 = arith.constant 1 : i32
      %59 = arith.subi %c1_i32_52, %13 : i32
      %c0_i32_53 = arith.constant 0 : i32
      %c0_i32_54 = arith.constant 0 : i32
      %c0_i32_55 = arith.constant 0 : i32
      %60 = tpu.memref_slice %arg3[%58, %c0_i32_53, %c0_i32_54, %c0_i32_55] : memref<2x18x18x128xf32, #tpu.memory_space<any>> -> memref<1x18x18x128xf32, #tpu.memory_space<any>>
      %61 = tpu.memref_squeeze %60 : memref<1x18x18x128xf32, #tpu.memory_space<any>> -> memref<18x18x128xf32, #tpu.memory_space<any>>
      %c0_i32_56 = arith.constant 0 : i32
      %c0_i32_57 = arith.constant 0 : i32
      %c0_i32_58 = arith.constant 0 : i32
      %62 = tpu.memref_slice %arg8[%59, %c0_i32_56, %c0_i32_57, %c0_i32_58] : memref<2x18x18x128xf32, #tpu.memory_space<vmem>> -> memref<1x18x18x128xf32, #tpu.memory_space<vmem>>
      %63 = tpu.memref_squeeze %62 : memref<1x18x18x128xf32, #tpu.memory_space<vmem>> -> memref<18x18x128xf32, #tpu.memory_space<vmem>>
      %64 = tpu.memref_slice %arg9[%59] : memref<2x!tpu.dma_semaphore, #tpu.memory_space<semaphore_mem>> -> memref<1x!tpu.dma_semaphore, #tpu.memory_space<semaphore_mem>>
      %65 = tpu.memref_squeeze %64 : memref<1x!tpu.dma_semaphore, #tpu.memory_space<semaphore_mem>> -> memref<!tpu.dma_semaphore, #tpu.memory_space<semaphore_mem>>
      tpu.enqueue_dma source(%61 : memref<18x18x128xf32, #tpu.memory_space<any>>) target(%63 : memref<18x18x128xf32, #tpu.memory_space<vmem>>) target_semaphore(%65 : memref<!tpu.dma_semaphore, #tpu.memory_space<semaphore_mem>>)
    } else {
    }
    %c0 = arith.constant 0 : index
    %c0_21 = arith.constant 0 : index
    %c0_22 = arith.constant 0 : index
    %37 = vector.load %arg4[%c0, %c0_21, %c0_22] : memref<3x3x128xf32, #tpu.memory_space<vmem>>, vector<1x1x128xf32>
    %38 = vector.shape_cast %37 : vector<1x1x128xf32> to vector<128xf32>
    %c0_23 = arith.constant 0 : index
    %c1 = arith.constant 1 : index
    %c0_24 = arith.constant 0 : index
    %39 = vector.load %arg4[%c0_23, %c1, %c0_24] : memref<3x3x128xf32, #tpu.memory_space<vmem>>, vector<1x1x128xf32>
    %40 = vector.shape_cast %39 : vector<1x1x128xf32> to vector<128xf32>
    %c0_25 = arith.constant 0 : index
    %c2 = arith.constant 2 : index
    %c0_26 = arith.constant 0 : index
    %41 = vector.load %arg4[%c0_25, %c2, %c0_26] : memref<3x3x128xf32, #tpu.memory_space<vmem>>, vector<1x1x128xf32>
    %42 = vector.shape_cast %41 : vector<1x1x128xf32> to vector<128xf32>
    %c1_27 = arith.constant 1 : index
    %c0_28 = arith.constant 0 : index
    %c0_29 = arith.constant 0 : index
    %43 = vector.load %arg4[%c1_27, %c0_28, %c0_29] : memref<3x3x128xf32, #tpu.memory_space<vmem>>, vector<1x1x128xf32>
    %44 = vector.shape_cast %43 : vector<1x1x128xf32> to vector<128xf32>
    %c1_30 = arith.constant 1 : index
    %c1_31 = arith.constant 1 : index
    %c0_32 = arith.constant 0 : index
    %45 = vector.load %arg4[%c1_30, %c1_31, %c0_32] : memref<3x3x128xf32, #tpu.memory_space<vmem>>, vector<1x1x128xf32>
    %46 = vector.shape_cast %45 : vector<1x1x128xf32> to vector<128xf32>
    %c1_33 = arith.constant 1 : index
    %c2_34 = arith.constant 2 : index
    %c0_35 = arith.constant 0 : index
    %47 = vector.load %arg4[%c1_33, %c2_34, %c0_35] : memref<3x3x128xf32, #tpu.memory_space<vmem>>, vector<1x1x128xf32>
    %48 = vector.shape_cast %47 : vector<1x1x128xf32> to vector<128xf32>
    %c2_36 = arith.constant 2 : index
    %c0_37 = arith.constant 0 : index
    %c0_38 = arith.constant 0 : index
    %49 = vector.load %arg4[%c2_36, %c0_37, %c0_38] : memref<3x3x128xf32, #tpu.memory_space<vmem>>, vector<1x1x128xf32>
    %50 = vector.shape_cast %49 : vector<1x1x128xf32> to vector<128xf32>
    %c2_39 = arith.constant 2 : index
    %c1_40 = arith.constant 1 : index
    %c0_41 = arith.constant 0 : index
    %51 = vector.load %arg4[%c2_39, %c1_40, %c0_41] : memref<3x3x128xf32, #tpu.memory_space<vmem>>, vector<1x1x128xf32>
    %52 = vector.shape_cast %51 : vector<1x1x128xf32> to vector<128xf32>
    %c2_42 = arith.constant 2 : index
    %c2_43 = arith.constant 2 : index
    %c0_44 = arith.constant 0 : index
    %53 = vector.load %arg4[%c2_42, %c2_43, %c0_44] : memref<3x3x128xf32, #tpu.memory_space<vmem>>, vector<1x1x128xf32>
    %54 = vector.shape_cast %53 : vector<1x1x128xf32> to vector<128xf32>
    %c0_45 = arith.constant 0 : index
    %c0_46 = arith.constant 0 : index
    %55 = vector.load %arg6[%c0_45, %c0_46] : memref<1x128xf32, #tpu.memory_space<vmem>>, vector<1x128xf32>
    %56 = vector.shape_cast %55 : vector<1x128xf32> to vector<128xf32>
    %c0_i32_47 = arith.constant 0 : i32
    %c2_i32_48 = arith.constant 2 : i32
    %57 = arith.addi %c0_i32_47, %c2_i32_48 : i32
    %c1_i32_49 = arith.constant 1 : i32
    scf.for %arg10 = %c0_i32_47 to %57 step %c1_i32_49  : i32 {
      %c8_i32 = arith.constant 8 : i32
      %58 = arith.muli %arg10, %c8_i32 : i32
      %59 = tpu.assume_multiple %58, 8 : i32
      %cst = arith.constant 0.000000e+00 : f32
      %60 = vector.broadcast %cst : f32 to vector<8x16x128xf32>
      %c0_i32_51 = arith.constant 0 : i32
      %61 = arith.addi %59, %c0_i32_51 : i32
      %62 = arith.index_cast %13 : i32 to index
      %63 = arith.index_cast %61 : i32 to index
      %c0_52 = arith.constant 0 : index
      %c0_53 = arith.constant 0 : index
      %64 = vector.load %arg8[%62, %63, %c0_52, %c0_53] : memref<2x18x18x128xf32, #tpu.memory_space<vmem>>, vector<1x8x16x128xf32>
      %65 = vector.shape_cast %64 : vector<1x8x16x128xf32> to vector<8x16x128xf32>
      %66 = vector.shape_cast %38 : vector<128xf32> to vector<1x1x128xf32>
      %67 = vector.broadcast %66 : vector<1x1x128xf32> to vector<8x16x128xf32>
      %68 = arith.mulf %65, %67 : vector<8x16x128xf32>
      %69 = arith.addf %60, %68 : vector<8x16x128xf32>
      %c0_i32_54 = arith.constant 0 : i32
      %70 = arith.addi %59, %c0_i32_54 : i32
      %71 = arith.index_cast %13 : i32 to index
      %72 = arith.index_cast %70 : i32 to index
      %c1_55 = arith.constant 1 : index
      %c0_56 = arith.constant 0 : index
      %73 = vector.load %arg8[%71, %72, %c1_55, %c0_56] : memref<2x18x18x128xf32, #tpu.memory_space<vmem>>, vector<1x8x16x128xf32>
      %74 = vector.shape_cast %73 : vector<1x8x16x128xf32> to vector<8x16x128xf32>
      %75 = vector.shape_cast %40 : vector<128xf32> to vector<1x1x128xf32>
      %76 = vector.broadcast %75 : vector<1x1x128xf32> to vector<8x16x128xf32>
      %77 = arith.mulf %74, %76 : vector<8x16x128xf32>
      %78 = arith.addf %69, %77 : vector<8x16x128xf32>
      %c0_i32_57 = arith.constant 0 : i32
      %79 = arith.addi %59, %c0_i32_57 : i32
      %80 = arith.index_cast %13 : i32 to index
      %81 = arith.index_cast %79 : i32 to index
      %c2_58 = arith.constant 2 : index
      %c0_59 = arith.constant 0 : index
      %82 = vector.load %arg8[%80, %81, %c2_58, %c0_59] : memref<2x18x18x128xf32, #tpu.memory_space<vmem>>, vector<1x8x16x128xf32>
      %83 = vector.shape_cast %82 : vector<1x8x16x128xf32> to vector<8x16x128xf32>
      %84 = vector.shape_cast %42 : vector<128xf32> to vector<1x1x128xf32>
      %85 = vector.broadcast %84 : vector<1x1x128xf32> to vector<8x16x128xf32>
      %86 = arith.mulf %83, %85 : vector<8x16x128xf32>
      %87 = arith.addf %78, %86 : vector<8x16x128xf32>
      %c1_i32_60 = arith.constant 1 : i32
      %88 = arith.addi %59, %c1_i32_60 : i32
      %89 = arith.index_cast %13 : i32 to index
      %90 = arith.index_cast %88 : i32 to index
      %c0_61 = arith.constant 0 : index
      %c0_62 = arith.constant 0 : index
      %91 = vector.load %arg8[%89, %90, %c0_61, %c0_62] : memref<2x18x18x128xf32, #tpu.memory_space<vmem>>, vector<1x8x16x128xf32>
      %92 = vector.shape_cast %91 : vector<1x8x16x128xf32> to vector<8x16x128xf32>
      %93 = vector.shape_cast %44 : vector<128xf32> to vector<1x1x128xf32>
      %94 = vector.broadcast %93 : vector<1x1x128xf32> to vector<8x16x128xf32>
      %95 = arith.mulf %92, %94 : vector<8x16x128xf32>
      %96 = arith.addf %87, %95 : vector<8x16x128xf32>
      %c1_i32_63 = arith.constant 1 : i32
      %97 = arith.addi %59, %c1_i32_63 : i32
      %98 = arith.index_cast %13 : i32 to index
      %99 = arith.index_cast %97 : i32 to index
      %c1_64 = arith.constant 1 : index
      %c0_65 = arith.constant 0 : index
      %100 = vector.load %arg8[%98, %99, %c1_64, %c0_65] : memref<2x18x18x128xf32, #tpu.memory_space<vmem>>, vector<1x8x16x128xf32>
      %101 = vector.shape_cast %100 : vector<1x8x16x128xf32> to vector<8x16x128xf32>
      %102 = vector.shape_cast %46 : vector<128xf32> to vector<1x1x128xf32>
      %103 = vector.broadcast %102 : vector<1x1x128xf32> to vector<8x16x128xf32>
      %104 = arith.mulf %101, %103 : vector<8x16x128xf32>
      %105 = arith.addf %96, %104 : vector<8x16x128xf32>
      %c1_i32_66 = arith.constant 1 : i32
      %106 = arith.addi %59, %c1_i32_66 : i32
      %107 = arith.index_cast %13 : i32 to index
      %108 = arith.index_cast %106 : i32 to index
      %c2_67 = arith.constant 2 : index
      %c0_68 = arith.constant 0 : index
      %109 = vector.load %arg8[%107, %108, %c2_67, %c0_68] : memref<2x18x18x128xf32, #tpu.memory_space<vmem>>, vector<1x8x16x128xf32>
      %110 = vector.shape_cast %109 : vector<1x8x16x128xf32> to vector<8x16x128xf32>
      %111 = vector.shape_cast %48 : vector<128xf32> to vector<1x1x128xf32>
      %112 = vector.broadcast %111 : vector<1x1x128xf32> to vector<8x16x128xf32>
      %113 = arith.mulf %110, %112 : vector<8x16x128xf32>
      %114 = arith.addf %105, %113 : vector<8x16x128xf32>
      %c2_i32_69 = arith.constant 2 : i32
      %115 = arith.addi %59, %c2_i32_69 : i32
      %116 = arith.index_cast %13 : i32 to index
      %117 = arith.index_cast %115 : i32 to index
      %c0_70 = arith.constant 0 : index
      %c0_71 = arith.constant 0 : index
      %118 = vector.load %arg8[%116, %117, %c0_70, %c0_71] : memref<2x18x18x128xf32, #tpu.memory_space<vmem>>, vector<1x8x16x128xf32>
      %119 = vector.shape_cast %118 : vector<1x8x16x128xf32> to vector<8x16x128xf32>
      %120 = vector.shape_cast %50 : vector<128xf32> to vector<1x1x128xf32>
      %121 = vector.broadcast %120 : vector<1x1x128xf32> to vector<8x16x128xf32>
      %122 = arith.mulf %119, %121 : vector<8x16x128xf32>
      %123 = arith.addf %114, %122 : vector<8x16x128xf32>
      %c2_i32_72 = arith.constant 2 : i32
      %124 = arith.addi %59, %c2_i32_72 : i32
      %125 = arith.index_cast %13 : i32 to index
      %126 = arith.index_cast %124 : i32 to index
      %c1_73 = arith.constant 1 : index
      %c0_74 = arith.constant 0 : index
      %127 = vector.load %arg8[%125, %126, %c1_73, %c0_74] : memref<2x18x18x128xf32, #tpu.memory_space<vmem>>, vector<1x8x16x128xf32>
      %128 = vector.shape_cast %127 : vector<1x8x16x128xf32> to vector<8x16x128xf32>
      %129 = vector.shape_cast %52 : vector<128xf32> to vector<1x1x128xf32>
      %130 = vector.broadcast %129 : vector<1x1x128xf32> to vector<8x16x128xf32>
      %131 = arith.mulf %128, %130 : vector<8x16x128xf32>
      %132 = arith.addf %123, %131 : vector<8x16x128xf32>
      %c2_i32_75 = arith.constant 2 : i32
      %133 = arith.addi %59, %c2_i32_75 : i32
      %134 = arith.index_cast %13 : i32 to index
      %135 = arith.index_cast %133 : i32 to index
      %c2_76 = arith.constant 2 : index
      %c0_77 = arith.constant 0 : index
      %136 = vector.load %arg8[%134, %135, %c2_76, %c0_77] : memref<2x18x18x128xf32, #tpu.memory_space<vmem>>, vector<1x8x16x128xf32>
      %137 = vector.shape_cast %136 : vector<1x8x16x128xf32> to vector<8x16x128xf32>
      %138 = vector.shape_cast %54 : vector<128xf32> to vector<1x1x128xf32>
      %139 = vector.broadcast %138 : vector<1x1x128xf32> to vector<8x16x128xf32>
      %140 = arith.mulf %137, %139 : vector<8x16x128xf32>
      %141 = arith.addf %132, %140 : vector<8x16x128xf32>
      %142 = vector.shape_cast %141 : vector<8x16x128xf32> to vector<128x128xf32>
      %143 = arith.truncf %142 : vector<128x128xf32> to vector<128x128xbf16>
      %c0_78 = arith.constant 0 : index
      %c0_79 = arith.constant 0 : index
      %144 = vector.load %arg5[%c0_78, %c0_79] : memref<128x128xbf16, #tpu.memory_space<vmem>>, vector<128x128xbf16>
      %cst_80 = arith.constant dense<0.000000e+00> : vector<128x128xf32>
      %145 = tpu.matmul %143, %144, %cst_80 {dimension_numbers = #tpu.dot_dimension_numbers<[1], [0], [0], [1], [0, 0, 1, 1], [], []>} : vector<128x128xbf16>, vector<128x128xbf16>, vector<128x128xf32> -> vector<128x128xf32>
      %146 = vector.shape_cast %56 : vector<128xf32> to vector<1x128xf32>
      %147 = vector.broadcast %146 : vector<1x128xf32> to vector<128x128xf32>
      %148 = arith.addf %145, %147 : vector<128x128xf32>
      %149 = vector.shape_cast %148 : vector<128x128xf32> to vector<8x16x128xf32>
      %c1_i32_81 = arith.constant 1 : i32
      %150 = arith.addi %c1_i32_81, %59 : i32
      %151 = arith.index_cast %13 : i32 to index
      %152 = arith.index_cast %150 : i32 to index
      %c1_82 = arith.constant 1 : index
      %c0_83 = arith.constant 0 : index
      %153 = vector.load %arg8[%151, %152, %c1_82, %c0_83] : memref<2x18x18x128xf32, #tpu.memory_space<vmem>>, vector<1x8x16x128xf32>
      %154 = vector.shape_cast %153 : vector<1x8x16x128xf32> to vector<8x16x128xf32>
      %155 = arith.addf %149, %154 : vector<8x16x128xf32>
      %cst_84 = arith.constant 0.000000e+00 : f32
      %156 = vector.broadcast %cst_84 : f32 to vector<8x16x128xf32>
      %157 = arith.maximumf %155, %156 : vector<8x16x128xf32>
      %c0_85 = arith.constant 0 : index
      %158 = arith.index_cast %59 : i32 to index
      %c0_86 = arith.constant 0 : index
      %c0_87 = arith.constant 0 : index
      %159 = vector.load %arg7[%c0_85, %158, %c0_86, %c0_87] : memref<1x16x16x128xf32, #tpu.memory_space<vmem>>, vector<1x8x16x128xf32>
      %160 = vector.shape_cast %159 : vector<1x8x16x128xf32> to vector<8x16x128xf32>
      %161 = vector.shape_cast %157 : vector<8x16x128xf32> to vector<1x8x16x128xf32>
      tpu.vector_store %arg7[%c0_85, %158, %c0_86, %c0_87], %161 {strides = array<i32>} : memref<1x16x16x128xf32, #tpu.memory_space<vmem>>, vector<1x8x16x128xf32>,
    }
    %c2_i32_50 = arith.constant 2 : i32
    return
  }
  func.func @transform_1(%arg0: i32, %arg1: i32, %arg2: i32) -> (i32, i32, i32) {
    %c0_i32 = arith.constant 0 : i32
    %c0_i32_0 = arith.constant 0 : i32
    %c0_i32_1 = arith.constant 0 : i32
    %c0_i32_2 = arith.constant 0 : i32
    return %c0_i32, %c0_i32_0, %c0_i32_1 : i32, i32, i32
  }
  func.func @transform_2(%arg0: i32, %arg1: i32, %arg2: i32) -> (i32, i32) {
    %c0_i32 = arith.constant 0 : i32
    %c0_i32_0 = arith.constant 0 : i32
    %c0_i32_1 = arith.constant 0 : i32
    return %c0_i32, %c0_i32_0 : i32, i32
  }
  func.func @transform_3(%arg0: i32, %arg1: i32, %arg2: i32) -> (i32, i32) {
    %c0_i32 = arith.constant 0 : i32
    %c0_i32_0 = arith.constant 0 : i32
    %c0_i32_1 = arith.constant 0 : i32
    return %c0_i32, %c0_i32_0 : i32, i32
  }
  func.func @transform_4(%arg0: i32, %arg1: i32, %arg2: i32) -> (i32, i32, i32, i32) {
    %c1_i32 = arith.constant 1 : i32
    %0 = arith.muli %arg0, %c1_i32 : i32
    %1 = arith.addi %0, %arg1 : i32
    %c0_i32 = arith.constant 0 : i32
    %c0_i32_0 = arith.constant 0 : i32
    %c0_i32_1 = arith.constant 0 : i32
    return %1, %arg2, %c0_i32, %c0_i32_0 : i32, i32, i32, i32
  }
}

</mosaic_0001>

<llo_original>
// kernel: tpu_custom_call.1
$region0: #{tpu_custom_call.1}
  #allocation0 [shape = 'u32[]', space=smem, size = 0x4, offset = 0x4, fixed_abs, tag = 'smem constant byte address 0x4 - core index']
  #allocation1 [shape = 'u32[144,128]{1,0:T(1,128)}', space=vmem, size = 0x12000, scoped, tag = 'internal scratch']
  #allocation2 [shape = 'f32[2,18,18,128]{3,2,1,0:T(8,128)}', space=vmem, size = 0x6c000, scoped, tag = 'scratch operand']
  #allocation3 [shape = 's32[2]{0}', space=sflag, size = 0x8, scoped, tag = 'scratch operand']
  #allocation6 [shape = 's32[]', space=sflag, size = 0x4, offset = 0, fixed_abs, tag = 'sflag constant byte address 0x0 - dummy sync flag']
  #allocation7 [shape = 's32[]', space=sflag, size = 0x4, offset = 0, fixed_abs, tag = 'sflag constant byte address 0x0 - dummy sync flag']
  #allocation8 [shape = 's32[]', space=sflag, size = 0x4, offset = 0, fixed_abs, tag = 'sflag constant byte address 0x0 - dummy sync flag']
  %s0 = inlined_call_operand.vmem [shape: f32[2,18,18,128], index: 0, kind: input, shape index: {}]
  %s1 = inlined_call_operand.vmem [shape: f32[3,3,128], index: 1, kind: input, shape index: {}]
  %s2 = inlined_call_operand.vmem [shape: bf16[128,128], index: 2, kind: input, shape index: {}]
  %s3 = inlined_call_operand.vmem [shape: f32[1,128], index: 3, kind: input, shape index: {}]
  %s4 = inlined_call_operand.hbm [shape: f32[2,16,16,128], index: 4, kind: output, shape index: {}]
  %s5 = sld [smem:[#allocation0]]
  $region175: #{tpu_custom_call.1} parent=0
    _
  %s7 = ssub.s32 1, %s5
  %s8 = scalar_select 0, %s7, %s5
  $region1: #{tpu_custom_call.1} parent=0
    #allocation4 [shape = 'u8[262144]{0}', space=vmem, size = 0x40000, scoped, tag = 'output window, operand 0']
    #allocation5 [shape = 's32[2]{0}', space=sflag, size = 0x8, scoped, tag = 'scoped memory for tpu_custom_call.1']
    %9 = vsyncpa [#allocation5], 0
    %s10 = scalar_lea.sflag [#allocation5], 1
    %11 = vsyncpa %s10, 0
    loop: start=0, step=1, limit=4
    $region2: #{tpu_custom_call.1} parent=1 // loop_pre_header
      _
    $region3: #{tpu_custom_call.1} parent=1 // loop_header
      %s13 = sphi 0, %s17
      %p14 = scmp.ge.s32.totalorder %s13, 4
      %s20 = sphi 0, %s39
      %s21 = sphi 0, %s35
      %s22 = sphi 0, %s31
      %s23 = sphi 0, %s20
      %s24 = sphi 0, %s21
      %s25 = sphi 0, %s22
      %s26 = sphi 0, %s23
      %s27 = sphi 0, %s24
      %s28 = sphi 0, %s25
      %s40 = sphi 0, %s40
      %s42 = sphi 0, %s40
      %s43 = sphi 0, %s42
      %s57 = sphi 0, %s43
      %s61 = sphi 0, %s61
      %s63 = sphi 0, %s61
      %s64 = sphi 0, %s63
      %s78 = sphi 0, %s64
      %s82 = sphi 0, %s82
      %s84 = sphi 0, %s82
      %s85 = sphi 0, %s84
      %s99 = sphi 0, %s85
      %s109 = sphi 0, %s111
      %s112 = sphi 0, %s109
      %s113 = sphi 0, %s112
      %s129 = sphi 0, %s113
    $region4: #{tpu_custom_call.1} parent=1 // loop_header_branch
      %16 = sbr.rel (%p14) target = $region8
    $region5: #{tpu_custom_call.1} parent=1 // loop_body
      %s18 = ssub.s32 %s13, 1
      %s19 = ssub.s32 %s13, 2
      %s29 = sadd.s32 1, %s22
      %p30 = scmp.ge.s32.totalorder %s29, 1
      %s31 = scalar_select %p30, 0, %s29
      %s32 = sadd.s32 1, %s21
      %s33 = scalar_select %p30, %s32, %s21
      %p34 = scmp.ge.s32.totalorder %s33, 1
      %s35 = scalar_select %p34, 0, %s33
      %s36 = sadd.s32 1, %s20
      %s37 = scalar_select %p34, %s36, %s20
      %p38 = scmp.ge.s32.totalorder %s37, 2
      %s39 = scalar_select %p38, 0, %s37
      %s41 = sadd.s32 %s40, 1
      %p44 = scmp.eq.s32.totalorder %s13, 1
      %p45 = scmp.ne.s32.totalorder %s40, %s42
      %p46 = scmp.eq.s32.totalorder %s13, 0
      %p47 = por %p45, %p46
      %p48 = scmp.ne.s32.totalorder %s40, %s42
      %p49 = scmp.eq.s32.totalorder %s18, 1
      %p50 = por %p48, %p49
      %p51 = scmp.ne.s32.totalorder %s42, %s43
      %p52 = scmp.eq.s32.totalorder %s18, 0
      %p53 = por %p51, %p52
      %p54 = scmp.ne.s32.totalorder %s42, %s43
      %p55 = scmp.eq.s32.totalorder %s19, 1
      %p56 = por %p54, %p55
      %p58 = scmp.ne.s32.totalorder %s43, %s57
      %p59 = scmp.eq.s32.totalorder %s19, 0
      %p60 = por %p58, %p59
      %s62 = sadd.s32 %s61, 1
      %p65 = scmp.eq.s32.totalorder %s13, 1
      %p66 = scmp.ne.s32.totalorder %s61, %s63
      %p67 = scmp.eq.s32.totalorder %s13, 0
      %p68 = por %p66, %p67
      %p69 = scmp.ne.s32.totalorder %s61, %s63
      %p70 = scmp.eq.s32.totalorder %s18, 1
      %p71 = por %p69, %p70
      %p72 = scmp.ne.s32.totalorder %s63, %s64
      %p73 = scmp.eq.s32.totalorder %s18, 0
      %p74 = por %p72, %p73
      %p75 = scmp.ne.s32.totalorder %s63, %s64
      %p76 = scmp.eq.s32.totalorder %s19, 1
      %p77 = por %p75, %p76
      %p79 = scmp.ne.s32.totalorder %s64, %s78
      %p80 = scmp.eq.s32.totalorder %s19, 0
      %p81 = por %p79, %p80
      %s83 = sadd.s32 %s82, 1
      %p86 = scmp.eq.s32.totalorder %s13, 1
      %p87 = scmp.ne.s32.totalorder %s82, %s84
      %p88 = scmp.eq.s32.totalorder %s13, 0
      %p89 = por %p87, %p88
      %p90 = scmp.ne.s32.totalorder %s82, %s84
      %p91 = scmp.eq.s32.totalorder %s18, 1
      %p92 = por %p90, %p91
      %p93 = scmp.ne.s32.totalorder %s84, %s85
      %p94 = scmp.eq.s32.totalorder %s18, 0
      %p95 = por %p93, %p94
      %p96 = scmp.ne.s32.totalorder %s84, %s85
      %p97 = scmp.eq.s32.totalorder %s19, 1
      %p98 = por %p96, %p97
      %p100 = scmp.ne.s32.totalorder %s85, %s99
      %p101 = scmp.eq.s32.totalorder %s19, 0
      %p102 = por %p100, %p101
      %s103 = sadd.s32 %s20, %s21
      %s104 = sadd.s32 %s39, %s35
      %s105 = ssub.s32 %s103, %s104
      %s106 = ssub.s32 %s22, %s31
      %s107 = sor.u32 %s105, %s106
      %p108 = scmp.eq.s32.totalorder %s107, 0
      %s110 = sadd.s32 %s109, 1
      %s111 = scalar_select %p108, %s109, %s110
      %p114 = pneg %p108
      %p115 = scmp.eq.s32.totalorder %s13, 1
      %p116 = por %p114, %p115
      %p117 = scmp.ne.s32.totalorder %s109, %s112
      %p118 = scmp.eq.s32.totalorder %s13, 0
      %p119 = por %p117, %p118
      %p120 = scmp.ne.s32.totalorder %s109, %s112
      %p121 = scmp.eq.s32.totalorder %s18, 1
      %p122 = por %p120, %p121
      %p123 = scmp.ne.s32.totalorder %s112, %s113
      %p124 = scmp.eq.s32.totalorder %s18, 0
      %p125 = por %p123, %p124
      %p126 = scmp.ne.s32.totalorder %s112, %s113
      %p127 = scmp.eq.s32.totalorder %s19, 1
      %p128 = por %p126, %p127
      %p130 = scmp.ne.s32.totalorder %s113, %s129
      %p131 = scmp.eq.s32.totalorder %s19, 0
      %p132 = por %p130, %p131
      %p133 = scmp.le.s32.totalorder 1, %s13
      %p134 = scmp.lt.s32.totalorder %s13, 3
      %p135 = pnand %p133, %p134
      %p136 = pneg %p135
      // Predicated region
      $region9: #{tpu_custom_call.1} parent=5 // pred_check
        _
      $region10: #{tpu_custom_call.1} parent=5 // pred_check_branch
        %138 = sbr.rel (%p135) target = $region12
      $region11: #{tpu_custom_call.1} parent=5 // pred_region
        %s139 = ssub.s32 %s13, 1
        // Predicated region
        $region13: #{tpu_custom_call.1} parent=11 // pred_check
          %p140 = pneg %p53
        $region14: #{tpu_custom_call.1} parent=11 // pred_check_branch
          %142 = sbr.rel (%p140) target = $region16
        $region15: #{tpu_custom_call.1} parent=11 // pred_region
          _
        $region16: #{tpu_custom_call.1} parent=11 // pred_fallthru
          _
        // Predicated region
        $region17: #{tpu_custom_call.1} parent=11 // pred_check
          %p143 = pneg %p74
        $region18: #{tpu_custom_call.1} parent=11 // pred_check_branch
          %145 = sbr.rel (%p143) target = $region20
        $region19: #{tpu_custom_call.1} parent=11 // pred_region
          _
        $region20: #{tpu_custom_call.1} parent=11 // pred_fallthru
          _
        // Predicated region
        $region21: #{tpu_custom_call.1} parent=11 // pred_check
          %p146 = pneg %p95
        $region22: #{tpu_custom_call.1} parent=11 // pred_check_branch
          %148 = sbr.rel (%p146) target = $region24
        $region23: #{tpu_custom_call.1} parent=11 // pred_region
          _
        $region24: #{tpu_custom_call.1} parent=11 // pred_fallthru
          _
      $region12: #{tpu_custom_call.1} parent=5 // pred_fallthru
        _
      %p149 = scmp.lt.s32.totalorder %s13, 2
      // Predicated region
      $region25: #{tpu_custom_call.1} parent=5 // pred_check
        %p150 = pneg %p149
      $region26: #{tpu_custom_call.1} parent=5 // pred_check_branch
        %152 = sbr.rel (%p150) target = $region28
      $region27: #{tpu_custom_call.1} parent=5 // pred_region
        _
      $region28: #{tpu_custom_call.1} parent=5 // pred_fallthru
        _
      %p153 = scmp.le.s32.totalorder 1, %s13
      %p154 = scmp.lt.s32.totalorder %s13, 3
      %p155 = pnand %p153, %p154
      %p156 = pneg %p155
      // Predicated region
      $region29: #{tpu_custom_call.1} parent=5 // pred_check
        _
      $region30: #{tpu_custom_call.1} parent=5 // pred_check_branch
        %158 = sbr.rel (%p155) target = $region32
      $region31: #{tpu_custom_call.1} parent=5 // pred_region
        %s159 = ssub.s32 %s13, 1
        %p160 = pneg %p53
        %p161 = pneg %p50
        %p162 = pneg %p74
        %p163 = pneg %p71
        %p164 = pneg %p95
        %p165 = pneg %p92
        %p166 = pneg %p125
        %p167 = pneg %p122
        %s168 = sand.u32 %s112, 1
        %s169 = scalar_lea.sflag [#allocation5], %s168
        %s170 = sand.u32 %s112, 1
        %s171 = smul.addr %s170, 256
        %s172 = scalar_lea.vmem [#allocation4], %s171
        %s173 = sadd.s32 %s23, %s24
        %s174 = smul.u32 16, %s25
        %s176 = sadd.s32 %s23, %s24
        %s177 = sadd.s32 %s24, %s25
        %p178 = scmp.lt.s32.totalorder %s177, 0
        %s179 = ssub.s32 0, %s177
        %s180 = scalar_select %p178, %s179, %s177
        %s181 = sand.u32 %s180, 1
        %s182 = ssub.s32 0, %s181
        %s183 = scalar_select %p178, %s182, %s181
        %p184 = scmp.ne.s32.totalorder %s183, 0
        %p185 = scmp.lt.s32.totalorder %s183, 0
        %p186 = pnand %p185, %p184
        %p187 = pneg %p186
        %s188 = sadd.s32 %s183, 2
        %s189 = scalar_select %p187, %s188, %s183
        %p190 = scmp.eq.s32.totalorder %s24, 0
        %p191 = scmp.eq.s32.totalorder %s25, 0
        %p192 = pnand %p190, %p191
        %p193 = pneg %p192
        // Predicated region
        $region33: #{tpu_custom_call.1} parent=31 // pred_check
          _
        $region34: #{tpu_custom_call.1} parent=31 // pred_check_branch
          %195 = sbr.rel (%p192) target = $region36
        $region35: #{tpu_custom_call.1} parent=31 // pred_region
          %s196 = smul.u32 %s176, 432
          %s197 = scalar_lea.vmem %s0, %s196
          %s198 = smul.u32 %s189, 432
          %s199 = scalar_lea.vmem [#allocation2], %s198
          %s200 = scalar_lea.sflag [#allocation3], %s189
          %p202 = scmp.lt.u32.totalorder 18, 8
          %p203 = pneg %p202
          // Predicated region
          $region37: #{tpu_custom_call.1} parent=35 // pred_check
            _
          $region38: #{tpu_custom_call.1} parent=35 // pred_check_branch
            %205 = sbr.rel (%p202) target = $region40
          $region39: #{tpu_custom_call.1} parent=35 // pred_region
            %s254 = sand.u32 18, 7
            %p255 = scmp.eq.s32.totalorder %s254, 0
            %p256 = pneg %p255
            // Predicated region
            $region52: #{tpu_custom_call.1} parent=39 // pred_check
              _
            $region53: #{tpu_custom_call.1} parent=39 // pred_check_branch
              %258 = sbr.rel (%p255) target = $region55
            $region54: #{tpu_custom_call.1} parent=39 // pred_region
              %s259 = sand.u32 18, 7
              %s260 = ssub.s32 18, %s259
              %s261 = scalar_lea.vmem %s197, %s260
              %s262 = ssub.s32 18, %s259
              %s263 = scalar_lea.vmem %s199, %s262 [#allocation2]
              loop: start=0, step=1, limit=1
              $region56: #{tpu_custom_call.1} parent=54 // loop_pre_header
                _
              $region57: #{tpu_custom_call.1} parent=54 // loop_header
                %s265 = sphi 0, %s269
                %p266 = scmp.ge.s32.totalorder %s265, 1
                %s270 = sphi %s197, %s197
                %s271 = sphi %s199, %s199
              $region58: #{tpu_custom_call.1} parent=54 // loop_header_branch
                %268 = sbr.rel (%p266) target = $region62
              $region59: #{tpu_custom_call.1} parent=54 // loop_body
                %v272 = vld [vmem:[%s270] sm:$0xff]
                %273 = vst [vmem:[%s271] sm:$0xff] %v272
                %v274 = vld [vmem:[%s270 + $0x8] sm:$0xff]
                %275 = vst [vmem:[%s271 + $0x8] sm:$0xff] %v274
                %v276 = vld [vmem:[%s270 + $0x18] sm:$0xff]
                %277 = vst [vmem:[%s271 + $0x18] sm:$0xff] %v276
                %v278 = vld [vmem:[%s270 + $0x20] sm:$0xff]
                %279 = vst [vmem:[%s271 + $0x20] sm:$0xff] %v278
                %v280 = vld [vmem:[%s270 + $0x30] sm:$0xff]
                %281 = vst [vmem:[%s271 + $0x30] sm:$0xff] %v280
                %v282 = vld [vmem:[%s270 + $0x38] sm:$0xff]
                %283 = vst [vmem:[%s271 + $0x38] sm:$0xff] %v282
                %v284 = vld [vmem:[%s270 + $0x48] sm:$0xff]
                %285 = vst [vmem:[%s271 + $0x48] sm:$0xff] %v284
                %v286 = vld [vmem:[%s270 + $0x50] sm:$0xff]
                %287 = vst [vmem:[%s271 + $0x50] sm:$0xff] %v286
                %v288 = vld [vmem:[%s270 + $0x60] sm:$0xff]
                %289 = vst [vmem:[%s271 + $0x60] sm:$0xff] %v288
                %v290 = vld [vmem:[%s270 + $0x68] sm:$0xff]
                %291 = vst [vmem:[%s271 + $0x68] sm:$0xff] %v290
                %v292 = vld [vmem:[%s270 + $0x78] sm:$0xff]
                %293 = vst [vmem:[%s271 + $0x78] sm:$0xff] %v292
                %v294 = vld [vmem:[%s270 + $0x80] sm:$0xff]
                %295 = vst [vmem:[%s271 + $0x80] sm:$0xff] %v294
                %v296 = vld [vmem:[%s270 + $0x90] sm:$0xff]
                %297 = vst [vmem:[%s271 + $0x90] sm:$0xff] %v296
                %v298 = vld [vmem:[%s270 + $0x98] sm:$0xff]
                %299 = vst [vmem:[%s271 + $0x98] sm:$0xff] %v298
                %v300 = vld [vmem:[%s270 + $0xa8] sm:$0xff]
                %301 = vst [vmem:[%s271 + $0xa8] sm:$0xff] %v300
                %v302 = vld [vmem:[%s270 + $0xb0] sm:$0xff]
                %303 = vst [vmem:[%s271 + $0xb0] sm:$0xff] %v302
                %v304 = vld [vmem:[%s270 + $0xc0] sm:$0xff]
                %305 = vst [vmem:[%s271 + $0xc0] sm:$0xff] %v304
                %v306 = vld [vmem:[%s270 + $0xc8] sm:$0xff]
                %307 = vst [vmem:[%s271 + $0xc8] sm:$0xff] %v306
                %v308 = vld [vmem:[%s270 + $0xd8] sm:$0xff]
                %309 = vst [vmem:[%s271 + $0xd8] sm:$0xff] %v308
                %v310 = vld [vmem:[%s270 + $0xe0] sm:$0xff]
                %311 = vst [vmem:[%s271 + $0xe0] sm:$0xff] %v310
                %v312 = vld [vmem:[%s270 + $0xf0] sm:$0xff]
                %313 = vst [vmem:[%s271 + $0xf0] sm:$0xff] %v312
                %v314 = vld [vmem:[%s270 + $0xf8] sm:$0xff]
                %315 = vst [vmem:[%s271 + $0xf8] sm:$0xff] %v314
                %v316 = vld [vmem:[%s270 + $0x108] sm:$0xff]
                %317 = vst [vmem:[%s271 + $0x108] sm:$0xff] %v316
                %v318 = vld [vmem:[%s270 + $0x110] sm:$0xff]
                %319 = vst [vmem:[%s271 + $0x110] sm:$0xff] %v318
                %v320 = vld [vmem:[%s270 + $0x120] sm:$0xff]
                %321 = vst [vmem:[%s271 + $0x120] sm:$0xff] %v320
                %v322 = vld [vmem:[%s270 + $0x128] sm:$0xff]
                %323 = vst [vmem:[%s271 + $0x128] sm:$0xff] %v322
                %v324 = vld [vmem:[%s270 + $0x138] sm:$0xff]
                %325 = vst [vmem:[%s271 + $0x138] sm:$0xff] %v324
                %v326 = vld [vmem:[%s270 + $0x140] sm:$0xff]
                %327 = vst [vmem:[%s271 + $0x140] sm:$0xff] %v326
                %v328 = vld [vmem:[%s270 + $0x150] sm:$0xff]
                %329 = vst [vmem:[%s271 + $0x150] sm:$0xff] %v328
                %v330 = vld [vmem:[%s270 + $0x158] sm:$0xff]
                %331 = vst [vmem:[%s271 + $0x158] sm:$0xff] %v330
                %v332 = vld [vmem:[%s270 + $0x168] sm:$0xff]
                %333 = vst [vmem:[%s271 + $0x168] sm:$0xff] %v332
                %v334 = vld [vmem:[%s270 + $0x170] sm:$0xff]
                %335 = vst [vmem:[%s271 + $0x170] sm:$0xff] %v334
                %v336 = vld [vmem:[%s270 + $0x180] sm:$0xff]
                %337 = vst [vmem:[%s271 + $0x180] sm:$0xff] %v336
                %v338 = vld [vmem:[%s270 + $0x188] sm:$0xff]
                %339 = vst [vmem:[%s271 + $0x188] sm:$0xff] %v338
                %v340 = vld [vmem:[%s270 + $0x198] sm:$0xff]
                %341 = vst [vmem:[%s271 + $0x198] sm:$0xff] %v340
                %v342 = vld [vmem:[%s270 + $0x1a0] sm:$0xff]
                %343 = vst [vmem:[%s271 + $0x1a0] sm:$0xff] %v342
              $region60: #{tpu_custom_call.1} parent=54 // loop_footer
                %s269 = sadd.s32 1, %s265
              $region61: #{tpu_custom_call.1} parent=54 // loop_footer_branch
                %264 = sbr.rel target = $region57
              $region62: #{tpu_custom_call.1} parent=54 // loop_exit
                _
              %s344 = sshllo.u32 0, %s259
              loop: start=0, step=1, limit=1
              $region63: #{tpu_custom_call.1} parent=54 // loop_pre_header
                _
              $region64: #{tpu_custom_call.1} parent=54 // loop_header
                %s346 = sphi 0, %s350
                %p347 = scmp.ge.s32.totalorder %s346, 1
                %s351 = sphi %s261, %s261
                %s352 = sphi %s263, %s263
              $region65: #{tpu_custom_call.1} parent=54 // loop_header_branch
                %349 = sbr.rel (%p347) target = $region69
              $region66: #{tpu_custom_call.1} parent=54 // loop_body
                %v353 = vld [vmem:[%s351] sm:%s344]
                %354 = vst [vmem:[%s352] sm:%s344] %v353
                %v355 = vld [vmem:[%s351 + $0x18] sm:%s344]
                %356 = vst [vmem:[%s352 + $0x18] sm:%s344] %v355
                %v357 = vld [vmem:[%s351 + $0x30] sm:%s344]
                %358 = vst [vmem:[%s352 + $0x30] sm:%s344] %v357
                %v359 = vld [vmem:[%s351 + $0x48] sm:%s344]
                %360 = vst [vmem:[%s352 + $0x48] sm:%s344] %v359
                %v361 = vld [vmem:[%s351 + $0x60] sm:%s344]
                %362 = vst [vmem:[%s352 + $0x60] sm:%s344] %v361
                %v363 = vld [vmem:[%s351 + $0x78] sm:%s344]
                %364 = vst [vmem:[%s352 + $0x78] sm:%s344] %v363
                %v365 = vld [vmem:[%s351 + $0x90] sm:%s344]
                %366 = vst [vmem:[%s352 + $0x90] sm:%s344] %v365
                %v367 = vld [vmem:[%s351 + $0xa8] sm:%s344]
                %368 = vst [vmem:[%s352 + $0xa8] sm:%s344] %v367
                %v369 = vld [vmem:[%s351 + $0xc0] sm:%s344]
                %370 = vst [vmem:[%s352 + $0xc0] sm:%s344] %v369
                %v371 = vld [vmem:[%s351 + $0xd8] sm:%s344]
                %372 = vst [vmem:[%s352 + $0xd8] sm:%s344] %v371
                %v373 = vld [vmem:[%s351 + $0xf0] sm:%s344]
                %374 = vst [vmem:[%s352 + $0xf0] sm:%s344] %v373
                %v375 = vld [vmem:[%s351 + $0x108] sm:%s344]
                %376 = vst [vmem:[%s352 + $0x108] sm:%s344] %v375
                %v377 = vld [vmem:[%s351 + $0x120] sm:%s344]
                %378 = vst [vmem:[%s352 + $0x120] sm:%s344] %v377
                %v379 = vld [vmem:[%s351 + $0x138] sm:%s344]
                %380 = vst [vmem:[%s352 + $0x138] sm:%s344] %v379
                %v381 = vld [vmem:[%s351 + $0x150] sm:%s344]
                %382 = vst [vmem:[%s352 + $0x150] sm:%s344] %v381
                %v383 = vld [vmem:[%s351 + $0x168] sm:%s344]
                %384 = vst [vmem:[%s352 + $0x168] sm:%s344] %v383
                %v385 = vld [vmem:[%s351 + $0x180] sm:%s344]
                %386 = vst [vmem:[%s352 + $0x180] sm:%s344] %v385
                %v387 = vld [vmem:[%s351 + $0x198] sm:%s344]
                %388 = vst [vmem:[%s352 + $0x198] sm:%s344] %v387
              $region67: #{tpu_custom_call.1} parent=54 // loop_footer
                %s350 = sadd.s32 1, %s346
              $region68: #{tpu_custom_call.1} parent=54 // loop_footer_branch
                %345 = sbr.rel target = $region64
              $region69: #{tpu_custom_call.1} parent=54 // loop_exit
                _
            $region55: #{tpu_custom_call.1} parent=39 // pred_fallthru
              _
          $region40: #{tpu_custom_call.1} parent=35 // pred_fallthru
            _
          // Predicated region
          $region41: #{tpu_custom_call.1} parent=35 // pred_check
            %p206 = pneg %p202
          $region42: #{tpu_custom_call.1} parent=35 // pred_check_branch
            %208 = sbr.rel (%p206) target = $region44
          $region43: #{tpu_custom_call.1} parent=35 // pred_region
            %s209 = sshllo.u32 0, 18
            loop: start=0, step=1, limit=1
            $region45: #{tpu_custom_call.1} parent=43 // loop_pre_header
              _
            $region46: #{tpu_custom_call.1} parent=43 // loop_header
              %s211 = sphi 0, %s215
              %p212 = scmp.ge.s32.totalorder %s211, 1
              %s216 = sphi %s197, %s197
              %s217 = sphi %s199, %s199
            $region47: #{tpu_custom_call.1} parent=43 // loop_header_branch
              %214 = sbr.rel (%p212) target = $region51
            $region48: #{tpu_custom_call.1} parent=43 // loop_body
              %v218 = vld [vmem:[%s216] sm:%s209]
              %219 = vst [vmem:[%s217] sm:%s209] %v218
              %v220 = vld [vmem:[%s216 + $0x18] sm:%s209]
              %221 = vst [vmem:[%s217 + $0x18] sm:%s209] %v220
              %v222 = vld [vmem:[%s216 + $0x30] sm:%s209]
              %223 = vst [vmem:[%s217 + $0x30] sm:%s209] %v222
              %v224 = vld [vmem:[%s216 + $0x48] sm:%s209]
              %225 = vst [vmem:[%s217 + $0x48] sm:%s209] %v224
              %v226 = vld [vmem:[%s216 + $0x60] sm:%s209]
              %227 = vst [vmem:[%s217 + $0x60] sm:%s209] %v226
              %v228 = vld [vmem:[%s216 + $0x78] sm:%s209]
              %229 = vst [vmem:[%s217 + $0x78] sm:%s209] %v228
              %v230 = vld [vmem:[%s216 + $0x90] sm:%s209]
              %231 = vst [vmem:[%s217 + $0x90] sm:%s209] %v230
              %v232 = vld [vmem:[%s216 + $0xa8] sm:%s209]
              %233 = vst [vmem:[%s217 + $0xa8] sm:%s209] %v232
              %v234 = vld [vmem:[%s216 + $0xc0] sm:%s209]
              %235 = vst [vmem:[%s217 + $0xc0] sm:%s209] %v234
              %v236 = vld [vmem:[%s216 + $0xd8] sm:%s209]
              %237 = vst [vmem:[%s217 + $0xd8] sm:%s209] %v236
              %v238 = vld [vmem:[%s216 + $0xf0] sm:%s209]
              %239 = vst [vmem:[%s217 + $0xf0] sm:%s209] %v238
              %v240 = vld [vmem:[%s216 + $0x108] sm:%s209]
              %241 = vst [vmem:[%s217 + $0x108] sm:%s209] %v240
              %v242 = vld [vmem:[%s216 + $0x120] sm:%s209]
              %243 = vst [vmem:[%s217 + $0x120] sm:%s209] %v242
              %v244 = vld [vmem:[%s216 + $0x138] sm:%s209]
              %245 = vst [vmem:[%s217 + $0x138] sm:%s209] %v244
              %v246 = vld [vmem:[%s216 + $0x150] sm:%s209]
              %247 = vst [vmem:[%s217 + $0x150] sm:%s209] %v246
              %v248 = vld [vmem:[%s216 + $0x168] sm:%s209]
              %249 = vst [vmem:[%s217 + $0x168] sm:%s209] %v248
              %v250 = vld [vmem:[%s216 + $0x180] sm:%s209]
              %251 = vst [vmem:[%s217 + $0x180] sm:%s209] %v250
              %v252 = vld [vmem:[%s216 + $0x198] sm:%s209]
              %253 = vst [vmem:[%s217 + $0x198] sm:%s209] %v252
            $region49: #{tpu_custom_call.1} parent=43 // loop_footer
              %s215 = sadd.s32 1, %s211
            $region50: #{tpu_custom_call.1} parent=43 // loop_footer_branch
              %210 = sbr.rel target = $region46
            $region51: #{tpu_custom_call.1} parent=43 // loop_exit
              _
          $region44: #{tpu_custom_call.1} parent=35 // pred_fallthru
            _
          // Predicated region
          $region70: #{tpu_custom_call.1} parent=35 // pred_check
            _
          $region71: #{tpu_custom_call.1} parent=35 // pred_check_branch
            %391 = sbr.rel (0) target = $region73
          $region72: #{tpu_custom_call.1} parent=35 // pred_region
            %392 = vsyncadd %s200, 5184
          $region73: #{tpu_custom_call.1} parent=35 // pred_fallthru
            _
        $region36: #{tpu_custom_call.1} parent=31 // pred_fallthru
          _
        %s393 = scalar_lea.sflag [#allocation3], %s189
        %s394 = smul.u32 18, 18
        %s395 = smul.u32 %s394, 1
        %s396 = sshll.u32 %s395, 4
        %397 = dma.done %s393, %s396
        %s398 = sadd.s32 %s25, 1
        %p399 = scmp.lt.s32.totalorder %s398, 1
        // Predicated region
        $region74: #{tpu_custom_call.1} parent=31 // pred_check
          %p400 = pneg %p399
        $region75: #{tpu_custom_call.1} parent=31 // pred_check_branch
          %402 = sbr.rel (%p400) target = $region77
        $region76: #{tpu_custom_call.1} parent=31 // pred_region
          %s403 = ssub.s32 1, %s189
          %s404 = smul.u32 %s398, 16
          %s405 = smul.u32 %s404, 24
          %s406 = smul.u32 %s176, 432
          %s407 = sadd.s32 %s405, %s406
          %s408 = scalar_lea.vmem %s0, %s407
          %s409 = smul.u32 %s403, 432
          %s410 = scalar_lea.vmem [#allocation2], %s409
          %s411 = scalar_lea.sflag [#allocation3], %s403
          %p413 = scmp.lt.u32.totalorder 18, 8
          %p414 = pneg %p413
          // Predicated region
          $region78: #{tpu_custom_call.1} parent=76 // pred_check
            _
          $region79: #{tpu_custom_call.1} parent=76 // pred_check_branch
            %416 = sbr.rel (%p413) target = $region81
          $region80: #{tpu_custom_call.1} parent=76 // pred_region
            %s465 = sand.u32 18, 7
            %p466 = scmp.eq.s32.totalorder %s465, 0
            %p467 = pneg %p466
            // Predicated region
            $region93: #{tpu_custom_call.1} parent=80 // pred_check
              _
            $region94: #{tpu_custom_call.1} parent=80 // pred_check_branch
              %469 = sbr.rel (%p466) target = $region96
            $region95: #{tpu_custom_call.1} parent=80 // pred_region
              %s470 = sand.u32 18, 7
              %s471 = ssub.s32 18, %s470
              %s472 = scalar_lea.vmem %s408, %s471
              %s473 = ssub.s32 18, %s470
              %s474 = scalar_lea.vmem %s410, %s473 [#allocation2]
              loop: start=0, step=1, limit=1
              $region97: #{tpu_custom_call.1} parent=95 // loop_pre_header
                _
              $region98: #{tpu_custom_call.1} parent=95 // loop_header
                %s476 = sphi 0, %s480
                %p477 = scmp.ge.s32.totalorder %s476, 1
                %s481 = sphi %s408, %s408
                %s482 = sphi %s410, %s410
              $region99: #{tpu_custom_call.1} parent=95 // loop_header_branch
                %479 = sbr.rel (%p477) target = $region103
              $region100: #{tpu_custom_call.1} parent=95 // loop_body
                %v483 = vld [vmem:[%s481] sm:$0xff]
                %484 = vst [vmem:[%s482] sm:$0xff] %v483
                %v485 = vld [vmem:[%s481 + $0x8] sm:$0xff]
                %486 = vst [vmem:[%s482 + $0x8] sm:$0xff] %v485
                %v487 = vld [vmem:[%s481 + $0x18] sm:$0xff]
                %488 = vst [vmem:[%s482 + $0x18] sm:$0xff] %v487
                %v489 = vld [vmem:[%s481 + $0x20] sm:$0xff]
                %490 = vst [vmem:[%s482 + $0x20] sm:$0xff] %v489
                %v491 = vld [vmem:[%s481 + $0x30] sm:$0xff]
                %492 = vst [vmem:[%s482 + $0x30] sm:$0xff] %v491
                %v493 = vld [vmem:[%s481 + $0x38] sm:$0xff]
                %494 = vst [vmem:[%s482 + $0x38] sm:$0xff] %v493
                %v495 = vld [vmem:[%s481 + $0x48] sm:$0xff]
                %496 = vst [vmem:[%s482 + $0x48] sm:$0xff] %v495
                %v497 = vld [vmem:[%s481 + $0x50] sm:$0xff]
                %498 = vst [vmem:[%s482 + $0x50] sm:$0xff] %v497
                %v499 = vld [vmem:[%s481 + $0x60] sm:$0xff]
                %500 = vst [vmem:[%s482 + $0x60] sm:$0xff] %v499
                %v501 = vld [vmem:[%s481 + $0x68] sm:$0xff]
                %502 = vst [vmem:[%s482 + $0x68] sm:$0xff] %v501
                %v503 = vld [vmem:[%s481 + $0x78] sm:$0xff]
                %504 = vst [vmem:[%s482 + $0x78] sm:$0xff] %v503
                %v505 = vld [vmem:[%s481 + $0x80] sm:$0xff]
                %506 = vst [vmem:[%s482 + $0x80] sm:$0xff] %v505
                %v507 = vld [vmem:[%s481 + $0x90] sm:$0xff]
                %508 = vst [vmem:[%s482 + $0x90] sm:$0xff] %v507
                %v509 = vld [vmem:[%s481 + $0x98] sm:$0xff]
                %510 = vst [vmem:[%s482 + $0x98] sm:$0xff] %v509
                %v511 = vld [vmem:[%s481 + $0xa8] sm:$0xff]
                %512 = vst [vmem:[%s482 + $0xa8] sm:$0xff] %v511
                %v513 = vld [vmem:[%s481 + $0xb0] sm:$0xff]
                %514 = vst [vmem:[%s482 + $0xb0] sm:$0xff] %v513
                %v515 = vld [vmem:[%s481 + $0xc0] sm:$0xff]
                %516 = vst [vmem:[%s482 + $0xc0] sm:$0xff] %v515
                %v517 = vld [vmem:[%s481 + $0xc8] sm:$0xff]
                %518 = vst [vmem:[%s482 + $0xc8] sm:$0xff] %v517
                %v519 = vld [vmem:[%s481 + $0xd8] sm:$0xff]
                %520 = vst [vmem:[%s482 + $0xd8] sm:$0xff] %v519
                %v521 = vld [vmem:[%s481 + $0xe0] sm:$0xff]
                %522 = vst [vmem:[%s482 + $0xe0] sm:$0xff] %v521
                %v523 = vld [vmem:[%s481 + $0xf0] sm:$0xff]
                %524 = vst [vmem:[%s482 + $0xf0] sm:$0xff] %v523
                %v525 = vld [vmem:[%s481 + $0xf8] sm:$0xff]
                %526 = vst [vmem:[%s482 + $0xf8] sm:$0xff] %v525
                %v527 = vld [vmem:[%s481 + $0x108] sm:$0xff]
                %528 = vst [vmem:[%s482 + $0x108] sm:$0xff] %v527
                %v529 = vld [vmem:[%s481 + $0x110] sm:$0xff]
                %530 = vst [vmem:[%s482 + $0x110] sm:$0xff] %v529
                %v531 = vld [vmem:[%s481 + $0x120] sm:$0xff]
                %532 = vst [vmem:[%s482 + $0x120] sm:$0xff] %v531
                %v533 = vld [vmem:[%s481 + $0x128] sm:$0xff]
                %534 = vst [vmem:[%s482 + $0x128] sm:$0xff] %v533
                %v535 = vld [vmem:[%s481 + $0x138] sm:$0xff]
                %536 = vst [vmem:[%s482 + $0x138] sm:$0xff] %v535
                %v537 = vld [vmem:[%s481 + $0x140] sm:$0xff]
                %538 = vst [vmem:[%s482 + $0x140] sm:$0xff] %v537
                %v539 = vld [vmem:[%s481 + $0x150] sm:$0xff]
                %540 = vst [vmem:[%s482 + $0x150] sm:$0xff] %v539
                %v541 = vld [vmem:[%s481 + $0x158] sm:$0xff]
                %542 = vst [vmem:[%s482 + $0x158] sm:$0xff] %v541
                %v543 = vld [vmem:[%s481 + $0x168] sm:$0xff]
                %544 = vst [vmem:[%s482 + $0x168] sm:$0xff] %v543
                %v545 = vld [vmem:[%s481 + $0x170] sm:$0xff]
                %546 = vst [vmem:[%s482 + $0x170] sm:$0xff] %v545
                %v547 = vld [vmem:[%s481 + $0x180] sm:$0xff]
                %548 = vst [vmem:[%s482 + $0x180] sm:$0xff] %v547
                %v549 = vld [vmem:[%s481 + $0x188] sm:$0xff]
                %550 = vst [vmem:[%s482 + $0x188] sm:$0xff] %v549
                %v551 = vld [vmem:[%s481 + $0x198] sm:$0xff]
                %552 = vst [vmem:[%s482 + $0x198] sm:$0xff] %v551
                %v553 = vld [vmem:[%s481 + $0x1a0] sm:$0xff]
                %554 = vst [vmem:[%s482 + $0x1a0] sm:$0xff] %v553
              $region101: #{tpu_custom_call.1} parent=95 // loop_footer
                %s480 = sadd.s32 1, %s476
              $region102: #{tpu_custom_call.1} parent=95 // loop_footer_branch
                %475 = sbr.rel target = $region98
              $region103: #{tpu_custom_call.1} parent=95 // loop_exit
                _
              %s555 = sshllo.u32 0, %s470
              loop: start=0, step=1, limit=1
              $region104: #{tpu_custom_call.1} parent=95 // loop_pre_header
                _
              $region105: #{tpu_custom_call.1} parent=95 // loop_header
                %s557 = sphi 0, %s561
                %p558 = scmp.ge.s32.totalorder %s557, 1
                %s562 = sphi %s472, %s472
                %s563 = sphi %s474, %s474
              $region106: #{tpu_custom_call.1} parent=95 // loop_header_branch
                %560 = sbr.rel (%p558) target = $region110
              $region107: #{tpu_custom_call.1} parent=95 // loop_body
                %v564 = vld [vmem:[%s562] sm:%s555]
                %565 = vst [vmem:[%s563] sm:%s555] %v564
                %v566 = vld [vmem:[%s562 + $0x18] sm:%s555]
                %567 = vst [vmem:[%s563 + $0x18] sm:%s555] %v566
                %v568 = vld [vmem:[%s562 + $0x30] sm:%s555]
                %569 = vst [vmem:[%s563 + $0x30] sm:%s555] %v568
                %v570 = vld [vmem:[%s562 + $0x48] sm:%s555]
                %571 = vst [vmem:[%s563 + $0x48] sm:%s555] %v570
                %v572 = vld [vmem:[%s562 + $0x60] sm:%s555]
                %573 = vst [vmem:[%s563 + $0x60] sm:%s555] %v572
                %v574 = vld [vmem:[%s562 + $0x78] sm:%s555]
                %575 = vst [vmem:[%s563 + $0x78] sm:%s555] %v574
                %v576 = vld [vmem:[%s562 + $0x90] sm:%s555]
                %577 = vst [vmem:[%s563 + $0x90] sm:%s555] %v576
                %v578 = vld [vmem:[%s562 + $0xa8] sm:%s555]
                %579 = vst [vmem:[%s563 + $0xa8] sm:%s555] %v578
                %v580 = vld [vmem:[%s562 + $0xc0] sm:%s555]
                %581 = vst [vmem:[%s563 + $0xc0] sm:%s555] %v580
                %v582 = vld [vmem:[%s562 + $0xd8] sm:%s555]
                %583 = vst [vmem:[%s563 + $0xd8] sm:%s555] %v582
                %v584 = vld [vmem:[%s562 + $0xf0] sm:%s555]
                %585 = vst [vmem:[%s563 + $0xf0] sm:%s555] %v584
                %v586 = vld [vmem:[%s562 + $0x108] sm:%s555]
                %587 = vst [vmem:[%s563 + $0x108] sm:%s555] %v586
                %v588 = vld [vmem:[%s562 + $0x120] sm:%s555]
                %589 = vst [vmem:[%s563 + $0x120] sm:%s555] %v588
                %v590 = vld [vmem:[%s562 + $0x138] sm:%s555]
                %591 = vst [vmem:[%s563 + $0x138] sm:%s555] %v590
                %v592 = vld [vmem:[%s562 + $0x150] sm:%s555]
                %593 = vst [vmem:[%s563 + $0x150] sm:%s555] %v592
                %v594 = vld [vmem:[%s562 + $0x168] sm:%s555]
                %595 = vst [vmem:[%s563 + $0x168] sm:%s555] %v594
                %v596 = vld [vmem:[%s562 + $0x180] sm:%s555]
                %597 = vst [vmem:[%s563 + $0x180] sm:%s555] %v596
                %v598 = vld [vmem:[%s562 + $0x198] sm:%s555]
                %599 = vst [vmem:[%s563 + $0x198] sm:%s555] %v598
              $region108: #{tpu_custom_call.1} parent=95 // loop_footer
                %s561 = sadd.s32 1, %s557
              $region109: #{tpu_custom_call.1} parent=95 // loop_footer_branch
                %556 = sbr.rel target = $region105
              $region110: #{tpu_custom_call.1} parent=95 // loop_exit
                _
            $region96: #{tpu_custom_call.1} parent=80 // pred_fallthru
              _
          $region81: #{tpu_custom_call.1} parent=76 // pred_fallthru
            _
          // Predicated region
          $region82: #{tpu_custom_call.1} parent=76 // pred_check
            %p417 = pneg %p413
          $region83: #{tpu_custom_call.1} parent=76 // pred_check_branch
            %419 = sbr.rel (%p417) target = $region85
          $region84: #{tpu_custom_call.1} parent=76 // pred_region
            %s420 = sshllo.u32 0, 18
            loop: start=0, step=1, limit=1
            $region86: #{tpu_custom_call.1} parent=84 // loop_pre_header
              _
            $region87: #{tpu_custom_call.1} parent=84 // loop_header
              %s422 = sphi 0, %s426
              %p423 = scmp.ge.s32.totalorder %s422, 1
              %s427 = sphi %s408, %s408
              %s428 = sphi %s410, %s410
            $region88: #{tpu_custom_call.1} parent=84 // loop_header_branch
              %425 = sbr.rel (%p423) target = $region92
            $region89: #{tpu_custom_call.1} parent=84 // loop_body
              %v429 = vld [vmem:[%s427] sm:%s420]
              %430 = vst [vmem:[%s428] sm:%s420] %v429
              %v431 = vld [vmem:[%s427 + $0x18] sm:%s420]
              %432 = vst [vmem:[%s428 + $0x18] sm:%s420] %v431
              %v433 = vld [vmem:[%s427 + $0x30] sm:%s420]
              %434 = vst [vmem:[%s428 + $0x30] sm:%s420] %v433
              %v435 = vld [vmem:[%s427 + $0x48] sm:%s420]
              %436 = vst [vmem:[%s428 + $0x48] sm:%s420] %v435
              %v437 = vld [vmem:[%s427 + $0x60] sm:%s420]
              %438 = vst [vmem:[%s428 + $0x60] sm:%s420] %v437
              %v439 = vld [vmem:[%s427 + $0x78] sm:%s420]
              %440 = vst [vmem:[%s428 + $0x78] sm:%s420] %v439
              %v441 = vld [vmem:[%s427 + $0x90] sm:%s420]
              %442 = vst [vmem:[%s428 + $0x90] sm:%s420] %v441
              %v443 = vld [vmem:[%s427 + $0xa8] sm:%s420]
              %444 = vst [vmem:[%s428 + $0xa8] sm:%s420] %v443
              %v445 = vld [vmem:[%s427 + $0xc0] sm:%s420]
              %446 = vst [vmem:[%s428 + $0xc0] sm:%s420] %v445
              %v447 = vld [vmem:[%s427 + $0xd8] sm:%s420]
              %448 = vst [vmem:[%s428 + $0xd8] sm:%s420] %v447
              %v449 = vld [vmem:[%s427 + $0xf0] sm:%s420]
              %450 = vst [vmem:[%s428 + $0xf0] sm:%s420] %v449
              %v451 = vld [vmem:[%s427 + $0x108] sm:%s420]
              %452 = vst [vmem:[%s428 + $0x108] sm:%s420] %v451
              %v453 = vld [vmem:[%s427 + $0x120] sm:%s420]
              %454 = vst [vmem:[%s428 + $0x120] sm:%s420] %v453
              %v455 = vld [vmem:[%s427 + $0x138] sm:%s420]
              %456 = vst [vmem:[%s428 + $0x138] sm:%s420] %v455
              %v457 = vld [vmem:[%s427 + $0x150] sm:%s420]
              %458 = vst [vmem:[%s428 + $0x150] sm:%s420] %v457
              %v459 = vld [vmem:[%s427 + $0x168] sm:%s420]
              %460 = vst [vmem:[%s428 + $0x168] sm:%s420] %v459
              %v461 = vld [vmem:[%s427 + $0x180] sm:%s420]
              %462 = vst [vmem:[%s428 + $0x180] sm:%s420] %v461
              %v463 = vld [vmem:[%s427 + $0x198] sm:%s420]
              %464 = vst [vmem:[%s428 + $0x198] sm:%s420] %v463
            $region90: #{tpu_custom_call.1} parent=84 // loop_footer
              %s426 = sadd.s32 1, %s422
            $region91: #{tpu_custom_call.1} parent=84 // loop_footer_branch
              %421 = sbr.rel target = $region87
            $region92: #{tpu_custom_call.1} parent=84 // loop_exit
              _
          $region85: #{tpu_custom_call.1} parent=76 // pred_fallthru
            _
          // Predicated region
          $region111: #{tpu_custom_call.1} parent=76 // pred_check
            _
          $region112: #{tpu_custom_call.1} parent=76 // pred_check_branch
            %602 = sbr.rel (0) target = $region114
          $region113: #{tpu_custom_call.1} parent=76 // pred_region
            %603 = vsyncadd %s411, 5184
          $region114: #{tpu_custom_call.1} parent=76 // pred_fallthru
            _
        $region77: #{tpu_custom_call.1} parent=31 // pred_fallthru
          _
        %p604 = scmp.eq.s32.totalorder %s398, 1
        %s605 = sadd.s32 %s24, 1
        %p606 = scmp.lt.s32.totalorder %s605, 1
        %p607 = pnand %p604, %p606
        %p608 = pneg %p607
        // Predicated region
        $region115: #{tpu_custom_call.1} parent=31 // pred_check
          _
        $region116: #{tpu_custom_call.1} parent=31 // pred_check_branch
          %610 = sbr.rel (%p607) target = $region118
        $region117: #{tpu_custom_call.1} parent=31 // pred_region
          %s611 = sadd.s32 %s176, 1
          %s612 = ssub.s32 1, %s189
          %s613 = smul.u32 %s611, 432
          %s614 = scalar_lea.vmem %s0, %s613
          %s615 = smul.u32 %s612, 432
          %s616 = scalar_lea.vmem [#allocation2], %s615
          %s617 = scalar_lea.sflag [#allocation3], %s612
          %p619 = scmp.lt.u32.totalorder 18, 8
          %p620 = pneg %p619
          // Predicated region
          $region119: #{tpu_custom_call.1} parent=117 // pred_check
            _
          $region120: #{tpu_custom_call.1} parent=117 // pred_check_branch
            %622 = sbr.rel (%p619) target = $region122
          $region121: #{tpu_custom_call.1} parent=117 // pred_region
            %s671 = sand.u32 18, 7
            %p672 = scmp.eq.s32.totalorder %s671, 0
            %p673 = pneg %p672
            // Predicated region
            $region134: #{tpu_custom_call.1} parent=121 // pred_check
              _
            $region135: #{tpu_custom_call.1} parent=121 // pred_check_branch
              %675 = sbr.rel (%p672) target = $region137
            $region136: #{tpu_custom_call.1} parent=121 // pred_region
              %s676 = sand.u32 18, 7
              %s677 = ssub.s32 18, %s676
              %s678 = scalar_lea.vmem %s614, %s677
              %s679 = ssub.s32 18, %s676
              %s680 = scalar_lea.vmem %s616, %s679 [#allocation2]
              loop: start=0, step=1, limit=1
              $region138: #{tpu_custom_call.1} parent=136 // loop_pre_header
                _
              $region139: #{tpu_custom_call.1} parent=136 // loop_header
                %s682 = sphi 0, %s686
                %p683 = scmp.ge.s32.totalorder %s682, 1
                %s687 = sphi %s614, %s614
                %s688 = sphi %s616, %s616
              $region140: #{tpu_custom_call.1} parent=136 // loop_header_branch
                %685 = sbr.rel (%p683) target = $region144
              $region141: #{tpu_custom_call.1} parent=136 // loop_body
                %v689 = vld [vmem:[%s687] sm:$0xff]
                %690 = vst [vmem:[%s688] sm:$0xff] %v689
                %v691 = vld [vmem:[%s687 + $0x8] sm:$0xff]
                %692 = vst [vmem:[%s688 + $0x8] sm:$0xff] %v691
                %v693 = vld [vmem:[%s687 + $0x18] sm:$0xff]
                %694 = vst [vmem:[%s688 + $0x18] sm:$0xff] %v693
                %v695 = vld [vmem:[%s687 + $0x20] sm:$0xff]
                %696 = vst [vmem:[%s688 + $0x20] sm:$0xff] %v695
                %v697 = vld [vmem:[%s687 + $0x30] sm:$0xff]
                %698 = vst [vmem:[%s688 + $0x30] sm:$0xff] %v697
                %v699 = vld [vmem:[%s687 + $0x38] sm:$0xff]
                %700 = vst [vmem:[%s688 + $0x38] sm:$0xff] %v699
                %v701 = vld [vmem:[%s687 + $0x48] sm:$0xff]
                %702 = vst [vmem:[%s688 + $0x48] sm:$0xff] %v701
                %v703 = vld [vmem:[%s687 + $0x50] sm:$0xff]
                %704 = vst [vmem:[%s688 + $0x50] sm:$0xff] %v703
                %v705 = vld [vmem:[%s687 + $0x60] sm:$0xff]
                %706 = vst [vmem:[%s688 + $0x60] sm:$0xff] %v705
                %v707 = vld [vmem:[%s687 + $0x68] sm:$0xff]
                %708 = vst [vmem:[%s688 + $0x68] sm:$0xff] %v707
                %v709 = vld [vmem:[%s687 + $0x78] sm:$0xff]
                %710 = vst [vmem:[%s688 + $0x78] sm:$0xff] %v709
                %v711 = vld [vmem:[%s687 + $0x80] sm:$0xff]
                %712 = vst [vmem:[%s688 + $0x80] sm:$0xff] %v711
                %v713 = vld [vmem:[%s687 + $0x90] sm:$0xff]
                %714 = vst [vmem:[%s688 + $0x90] sm:$0xff] %v713
                %v715 = vld [vmem:[%s687 + $0x98] sm:$0xff]
                %716 = vst [vmem:[%s688 + $0x98] sm:$0xff] %v715
                %v717 = vld [vmem:[%s687 + $0xa8] sm:$0xff]
                %718 = vst [vmem:[%s688 + $0xa8] sm:$0xff] %v717
                %v719 = vld [vmem:[%s687 + $0xb0] sm:$0xff]
                %720 = vst [vmem:[%s688 + $0xb0] sm:$0xff] %v719
                %v721 = vld [vmem:[%s687 + $0xc0] sm:$0xff]
                %722 = vst [vmem:[%s688 + $0xc0] sm:$0xff] %v721
                %v723 = vld [vmem:[%s687 + $0xc8] sm:$0xff]
                %724 = vst [vmem:[%s688 + $0xc8] sm:$0xff] %v723
                %v725 = vld [vmem:[%s687 + $0xd8] sm:$0xff]
                %726 = vst [vmem:[%s688 + $0xd8] sm:$0xff] %v725
                %v727 = vld [vmem:[%s687 + $0xe0] sm:$0xff]
                %728 = vst [vmem:[%s688 + $0xe0] sm:$0xff] %v727
                %v729 = vld [vmem:[%s687 + $0xf0] sm:$0xff]
                %730 = vst [vmem:[%s688 + $0xf0] sm:$0xff] %v729
                %v731 = vld [vmem:[%s687 + $0xf8] sm:$0xff]
                %732 = vst [vmem:[%s688 + $0xf8] sm:$0xff] %v731
                %v733 = vld [vmem:[%s687 + $0x108] sm:$0xff]
                %734 = vst [vmem:[%s688 + $0x108] sm:$0xff] %v733
                %v735 = vld [vmem:[%s687 + $0x110] sm:$0xff]
                %736 = vst [vmem:[%s688 + $0x110] sm:$0xff] %v735
                %v737 = vld [vmem:[%s687 + $0x120] sm:$0xff]
                %738 = vst [vmem:[%s688 + $0x120] sm:$0xff] %v737
                %v739 = vld [vmem:[%s687 + $0x128] sm:$0xff]
                %740 = vst [vmem:[%s688 + $0x128] sm:$0xff] %v739
                %v741 = vld [vmem:[%s687 + $0x138] sm:$0xff]
                %742 = vst [vmem:[%s688 + $0x138] sm:$0xff] %v741
                %v743 = vld [vmem:[%s687 + $0x140] sm:$0xff]
                %744 = vst [vmem:[%s688 + $0x140] sm:$0xff] %v743
                %v745 = vld [vmem:[%s687 + $0x150] sm:$0xff]
                %746 = vst [vmem:[%s688 + $0x150] sm:$0xff] %v745
                %v747 = vld [vmem:[%s687 + $0x158] sm:$0xff]
                %748 = vst [vmem:[%s688 + $0x158] sm:$0xff] %v747
                %v749 = vld [vmem:[%s687 + $0x168] sm:$0xff]
                %750 = vst [vmem:[%s688 + $0x168] sm:$0xff] %v749
                %v751 = vld [vmem:[%s687 + $0x170] sm:$0xff]
                %752 = vst [vmem:[%s688 + $0x170] sm:$0xff] %v751
                %v753 = vld [vmem:[%s687 + $0x180] sm:$0xff]
                %754 = vst [vmem:[%s688 + $0x180] sm:$0xff] %v753
                %v755 = vld [vmem:[%s687 + $0x188] sm:$0xff]
                %756 = vst [vmem:[%s688 + $0x188] sm:$0xff] %v755
                %v757 = vld [vmem:[%s687 + $0x198] sm:$0xff]
                %758 = vst [vmem:[%s688 + $0x198] sm:$0xff] %v757
                %v759 = vld [vmem:[%s687 + $0x1a0] sm:$0xff]
                %760 = vst [vmem:[%s688 + $0x1a0] sm:$0xff] %v759
              $region142: #{tpu_custom_call.1} parent=136 // loop_footer
                %s686 = sadd.s32 1, %s682
              $region143: #{tpu_custom_call.1} parent=136 // loop_footer_branch
                %681 = sbr.rel target = $region139
              $region144: #{tpu_custom_call.1} parent=136 // loop_exit
                _
              %s761 = sshllo.u32 0, %s676
              loop: start=0, step=1, limit=1
              $region145: #{tpu_custom_call.1} parent=136 // loop_pre_header
                _
              $region146: #{tpu_custom_call.1} parent=136 // loop_header
                %s763 = sphi 0, %s767
                %p764 = scmp.ge.s32.totalorder %s763, 1
                %s768 = sphi %s678, %s678
                %s769 = sphi %s680, %s680
              $region147: #{tpu_custom_call.1} parent=136 // loop_header_branch
                %766 = sbr.rel (%p764) target = $region151
              $region148: #{tpu_custom_call.1} parent=136 // loop_body
                %v770 = vld [vmem:[%s768] sm:%s761]
                %771 = vst [vmem:[%s769] sm:%s761] %v770
                %v772 = vld [vmem:[%s768 + $0x18] sm:%s761]
                %773 = vst [vmem:[%s769 + $0x18] sm:%s761] %v772
                %v774 = vld [vmem:[%s768 + $0x30] sm:%s761]
                %775 = vst [vmem:[%s769 + $0x30] sm:%s761] %v774
                %v776 = vld [vmem:[%s768 + $0x48] sm:%s761]
                %777 = vst [vmem:[%s769 + $0x48] sm:%s761] %v776
                %v778 = vld [vmem:[%s768 + $0x60] sm:%s761]
                %779 = vst [vmem:[%s769 + $0x60] sm:%s761] %v778
                %v780 = vld [vmem:[%s768 + $0x78] sm:%s761]
                %781 = vst [vmem:[%s769 + $0x78] sm:%s761] %v780
                %v782 = vld [vmem:[%s768 + $0x90] sm:%s761]
                %783 = vst [vmem:[%s769 + $0x90] sm:%s761] %v782
                %v784 = vld [vmem:[%s768 + $0xa8] sm:%s761]
                %785 = vst [vmem:[%s769 + $0xa8] sm:%s761] %v784
                %v786 = vld [vmem:[%s768 + $0xc0] sm:%s761]
                %787 = vst [vmem:[%s769 + $0xc0] sm:%s761] %v786
                %v788 = vld [vmem:[%s768 + $0xd8] sm:%s761]
                %789 = vst [vmem:[%s769 + $0xd8] sm:%s761] %v788
                %v790 = vld [vmem:[%s768 + $0xf0] sm:%s761]
                %791 = vst [vmem:[%s769 + $0xf0] sm:%s761] %v790
                %v792 = vld [vmem:[%s768 + $0x108] sm:%s761]
                %793 = vst [vmem:[%s769 + $0x108] sm:%s761] %v792
                %v794 = vld [vmem:[%s768 + $0x120] sm:%s761]
                %795 = vst [vmem:[%s769 + $0x120] sm:%s761] %v794
                %v796 = vld [vmem:[%s768 + $0x138] sm:%s761]
                %797 = vst [vmem:[%s769 + $0x138] sm:%s761] %v796
                %v798 = vld [vmem:[%s768 + $0x150] sm:%s761]
                %799 = vst [vmem:[%s769 + $0x150] sm:%s761] %v798
                %v800 = vld [vmem:[%s768 + $0x168] sm:%s761]
                %801 = vst [vmem:[%s769 + $0x168] sm:%s761] %v800
                %v802 = vld [vmem:[%s768 + $0x180] sm:%s761]
                %803 = vst [vmem:[%s769 + $0x180] sm:%s761] %v802
                %v804 = vld [vmem:[%s768 + $0x198] sm:%s761]
                %805 = vst [vmem:[%s769 + $0x198] sm:%s761] %v804
              $region149: #{tpu_custom_call.1} parent=136 // loop_footer
                %s767 = sadd.s32 1, %s763
              $region150: #{tpu_custom_call.1} parent=136 // loop_footer_branch
                %762 = sbr.rel target = $region146
              $region151: #{tpu_custom_call.1} parent=136 // loop_exit
                _
            $region137: #{tpu_custom_call.1} parent=121 // pred_fallthru
              _
          $region122: #{tpu_custom_call.1} parent=117 // pred_fallthru
            _
          // Predicated region
          $region123: #{tpu_custom_call.1} parent=117 // pred_check
            %p623 = pneg %p619
          $region124: #{tpu_custom_call.1} parent=117 // pred_check_branch
            %625 = sbr.rel (%p623) target = $region126
          $region125: #{tpu_custom_call.1} parent=117 // pred_region
            %s626 = sshllo.u32 0, 18
            loop: start=0, step=1, limit=1
            $region127: #{tpu_custom_call.1} parent=125 // loop_pre_header
              _
            $region128: #{tpu_custom_call.1} parent=125 // loop_header
              %s628 = sphi 0, %s632
              %p629 = scmp.ge.s32.totalorder %s628, 1
              %s633 = sphi %s614, %s614
              %s634 = sphi %s616, %s616
            $region129: #{tpu_custom_call.1} parent=125 // loop_header_branch
              %631 = sbr.rel (%p629) target = $region133
            $region130: #{tpu_custom_call.1} parent=125 // loop_body
              %v635 = vld [vmem:[%s633] sm:%s626]
              %636 = vst [vmem:[%s634] sm:%s626] %v635
              %v637 = vld [vmem:[%s633 + $0x18] sm:%s626]
              %638 = vst [vmem:[%s634 + $0x18] sm:%s626] %v637
              %v639 = vld [vmem:[%s633 + $0x30] sm:%s626]
              %640 = vst [vmem:[%s634 + $0x30] sm:%s626] %v639
              %v641 = vld [vmem:[%s633 + $0x48] sm:%s626]
              %642 = vst [vmem:[%s634 + $0x48] sm:%s626] %v641
              %v643 = vld [vmem:[%s633 + $0x60] sm:%s626]
              %644 = vst [vmem:[%s634 + $0x60] sm:%s626] %v643
              %v645 = vld [vmem:[%s633 + $0x78] sm:%s626]
              %646 = vst [vmem:[%s634 + $0x78] sm:%s626] %v645
              %v647 = vld [vmem:[%s633 + $0x90] sm:%s626]
              %648 = vst [vmem:[%s634 + $0x90] sm:%s626] %v647
              %v649 = vld [vmem:[%s633 + $0xa8] sm:%s626]
              %650 = vst [vmem:[%s634 + $0xa8] sm:%s626] %v649
              %v651 = vld [vmem:[%s633 + $0xc0] sm:%s626]
              %652 = vst [vmem:[%s634 + $0xc0] sm:%s626] %v651
              %v653 = vld [vmem:[%s633 + $0xd8] sm:%s626]
              %654 = vst [vmem:[%s634 + $0xd8] sm:%s626] %v653
              %v655 = vld [vmem:[%s633 + $0xf0] sm:%s626]
              %656 = vst [vmem:[%s634 + $0xf0] sm:%s626] %v655
              %v657 = vld [vmem:[%s633 + $0x108] sm:%s626]
              %658 = vst [vmem:[%s634 + $0x108] sm:%s626] %v657
              %v659 = vld [vmem:[%s633 + $0x120] sm:%s626]
              %660 = vst [vmem:[%s634 + $0x120] sm:%s626] %v659
              %v661 = vld [vmem:[%s633 + $0x138] sm:%s626]
              %662 = vst [vmem:[%s634 + $0x138] sm:%s626] %v661
              %v663 = vld [vmem:[%s633 + $0x150] sm:%s626]
              %664 = vst [vmem:[%s634 + $0x150] sm:%s626] %v663
              %v665 = vld [vmem:[%s633 + $0x168] sm:%s626]
              %666 = vst [vmem:[%s634 + $0x168] sm:%s626] %v665
              %v667 = vld [vmem:[%s633 + $0x180] sm:%s626]
              %668 = vst [vmem:[%s634 + $0x180] sm:%s626] %v667
              %v669 = vld [vmem:[%s633 + $0x198] sm:%s626]
              %670 = vst [vmem:[%s634 + $0x198] sm:%s626] %v669
            $region131: #{tpu_custom_call.1} parent=125 // loop_footer
              %s632 = sadd.s32 1, %s628
            $region132: #{tpu_custom_call.1} parent=125 // loop_footer_branch
              %627 = sbr.rel target = $region128
            $region133: #{tpu_custom_call.1} parent=125 // loop_exit
              _
          $region126: #{tpu_custom_call.1} parent=117 // pred_fallthru
            _
          // Predicated region
          $region152: #{tpu_custom_call.1} parent=117 // pred_check
            _
          $region153: #{tpu_custom_call.1} parent=117 // pred_check_branch
            %808 = sbr.rel (0) target = $region155
          $region154: #{tpu_custom_call.1} parent=117 // pred_region
            %809 = vsyncadd %s617, 5184
          $region155: #{tpu_custom_call.1} parent=117 // pred_fallthru
            _
        $region118: #{tpu_custom_call.1} parent=31 // pred_fallthru
          _
        %v810 = vld [vmem:[%s1] sm:$0x1]
        %v811 = vld [vmem:[%s1 + $0x1] sm:$0x1]
        %v812 = vld [vmem:[%s1 + $0x2] sm:$0x1]
        %s813 = scalar_lea.vmem %s1, 4
        %v814 = vld [vmem:[%s813] sm:$0x1]
        %v815 = vld [vmem:[%s813 + $0x1] sm:$0x1]
        %v816 = vld [vmem:[%s813 + $0x2] sm:$0x1]
        %s817 = scalar_lea.vmem %s1, 8
        %v818 = vld [vmem:[%s817] sm:$0x1]
        %v819 = vld [vmem:[%s817 + $0x1] sm:$0x1]
        %v820 = vld [vmem:[%s817 + $0x2] sm:$0x1]
        %v821 = vld [vmem:[%s3] sm:$0x1]
        loop: start=0, step=1, limit=2
        $region156: #{tpu_custom_call.1} parent=31 // loop_pre_header
          _
        $region157: #{tpu_custom_call.1} parent=31 // loop_header
          %s823 = sphi 0, %s827
          %p824 = scmp.ge.s32.totalorder %s823, 2
        $region158: #{tpu_custom_call.1} parent=31 // loop_header_branch
          %826 = sbr.rel (%p824) target = $region162
        $region159: #{tpu_custom_call.1} parent=31 // loop_body
          %s828 = smul.u32 %s823, 8
          %s829 = smul.u32 %s828, 24
          %s830 = smul.u32 %s189, 432
          %s831 = sadd.s32 %s829, %s830
          %s832 = scalar_lea.vmem [#allocation2], %s831
          %v833 = vld [vmem:[%s832] sm:$0xff]
          %v834 = vld [vmem:[%s832 + $0x8] sm:$0xff]
          %v835 = vld [vmem:[%s832 + $0x18] sm:$0xff]
          %v836 = vld [vmem:[%s832 + $0x20] sm:$0xff]
          %v837 = vld [vmem:[%s832 + $0x30] sm:$0xff]
          %v838 = vld [vmem:[%s832 + $0x38] sm:$0xff]
          %v839 = vld [vmem:[%s832 + $0x48] sm:$0xff]
          %v840 = vld [vmem:[%s832 + $0x50] sm:$0xff]
          %v841 = vld [vmem:[%s832 + $0x60] sm:$0xff]
          %v842 = vld [vmem:[%s832 + $0x68] sm:$0xff]
          %v843 = vld [vmem:[%s832 + $0x78] sm:$0xff]
          %v844 = vld [vmem:[%s832 + $0x80] sm:$0xff]
          %v845 = vld [vmem:[%s832 + $0x90] sm:$0xff]
          %v846 = vld [vmem:[%s832 + $0x98] sm:$0xff]
          %v847 = vld [vmem:[%s832 + $0xa8] sm:$0xff]
          %v848 = vld [vmem:[%s832 + $0xb0] sm:$0xff]
          %v849 = vlaneseq
          %v850 = vshrl.u32 %v849, 7
          %v851 = vsub.s32 0, %v850
          %v852 = vrot.slane %v810, %v851
          %v853 = vmul.f32 %v833, %v852
          %v854 = vmul.f32 %v834, %v852
          %v855 = vmul.f32 %v835, %v852
          %v856 = vmul.f32 %v836, %v852
          %v857 = vmul.f32 %v837, %v852
          %v858 = vmul.f32 %v838, %v852
          %v859 = vmul.f32 %v839, %v852
          %v860 = vmul.f32 %v840, %v852
          %v861 = vmul.f32 %v841, %v852
          %v862 = vmul.f32 %v842, %v852
          %v863 = vmul.f32 %v843, %v852
          %v864 = vmul.f32 %v844, %v852
          %v865 = vmul.f32 %v845, %v852
          %v866 = vmul.f32 %v846, %v852
          %v867 = vmul.f32 %v847, %v852
          %v868 = vmul.f32 %v848, %v852
          %v869 = vadd.f32 %v853, 0.0
          %v870 = vadd.f32 %v854, 0.0
          %v871 = vadd.f32 %v855, 0.0
          %v872 = vadd.f32 %v856, 0.0
          %v873 = vadd.f32 %v857, 0.0
          %v874 = vadd.f32 %v858, 0.0
          %v875 = vadd.f32 %v859, 0.0
          %v876 = vadd.f32 %v860, 0.0
          %v877 = vadd.f32 %v861, 0.0
          %v878 = vadd.f32 %v862, 0.0
          %v879 = vadd.f32 %v863, 0.0
          %v880 = vadd.f32 %v864, 0.0
          %v881 = vadd.f32 %v865, 0.0
          %v882 = vadd.f32 %v866, 0.0
          %v883 = vadd.f32 %v867, 0.0
          %v884 = vadd.f32 %v868, 0.0
          %v885 = vld [vmem:[%s832 + $0x1] sm:$0xff]
          %v886 = vld [vmem:[%s832 + $0x9] sm:$0xff]
          %v887 = vld [vmem:[%s832 + $0x19] sm:$0xff]
          %v888 = vld [vmem:[%s832 + $0x21] sm:$0xff]
          %v889 = vld [vmem:[%s832 + $0x31] sm:$0xff]
          %v890 = vld [vmem:[%s832 + $0x39] sm:$0xff]
          %v891 = vld [vmem:[%s832 + $0x49] sm:$0xff]
          %v892 = vld [vmem:[%s832 + $0x51] sm:$0xff]
          %v893 = vld [vmem:[%s832 + $0x61] sm:$0xff]
          %v894 = vld [vmem:[%s832 + $0x69] sm:$0xff]
          %v895 = vld [vmem:[%s832 + $0x79] sm:$0xff]
          %v896 = vld [vmem:[%s832 + $0x81] sm:$0xff]
          %v897 = vld [vmem:[%s832 + $0x91] sm:$0xff]
          %v898 = vld [vmem:[%s832 + $0x99] sm:$0xff]
          %v899 = vld [vmem:[%s832 + $0xa9] sm:$0xff]
          %v900 = vld [vmem:[%s832 + $0xb1] sm:$0xff]
          %v901 = vlaneseq
          %v902 = vshrl.u32 %v901, 7
          %v903 = vsub.s32 0, %v902
          %v904 = vrot.slane %v811, %v903
          %v905 = vmul.f32 %v885, %v904
          %v906 = vmul.f32 %v886, %v904
          %v907 = vmul.f32 %v887, %v904
          %v908 = vmul.f32 %v888, %v904
          %v909 = vmul.f32 %v889, %v904
          %v910 = vmul.f32 %v890, %v904
          %v911 = vmul.f32 %v891, %v904
          %v912 = vmul.f32 %v892, %v904
          %v913 = vmul.f32 %v893, %v904
          %v914 = vmul.f32 %v894, %v904
          %v915 = vmul.f32 %v895, %v904
          %v916 = vmul.f32 %v896, %v904
          %v917 = vmul.f32 %v897, %v904
          %v918 = vmul.f32 %v898, %v904
          %v919 = vmul.f32 %v899, %v904
          %v920 = vmul.f32 %v900, %v904
          %v921 = vadd.f32 %v869, %v905
          %v922 = vadd.f32 %v870, %v906
          %v923 = vadd.f32 %v871, %v907
          %v924 = vadd.f32 %v872, %v908
          %v925 = vadd.f32 %v873, %v909
          %v926 = vadd.f32 %v874, %v910
          %v927 = vadd.f32 %v875, %v911
          %v928 = vadd.f32 %v876, %v912
          %v929 = vadd.f32 %v877, %v913
          %v930 = vadd.f32 %v878, %v914
          %v931 = vadd.f32 %v879, %v915
          %v932 = vadd.f32 %v880, %v916
          %v933 = vadd.f32 %v881, %v917
          %v934 = vadd.f32 %v882, %v918
          %v935 = vadd.f32 %v883, %v919
          %v936 = vadd.f32 %v884, %v920
          %v937 = vld [vmem:[%s832 + $0x2] sm:$0xff]
          %v938 = vld [vmem:[%s832 + $0xa] sm:$0xff]
          %v939 = vld [vmem:[%s832 + $0x1a] sm:$0xff]
          %v940 = vld [vmem:[%s832 + $0x22] sm:$0xff]
          %v941 = vld [vmem:[%s832 + $0x32] sm:$0xff]
          %v942 = vld [vmem:[%s832 + $0x3a] sm:$0xff]
          %v943 = vld [vmem:[%s832 + $0x4a] sm:$0xff]
          %v944 = vld [vmem:[%s832 + $0x52] sm:$0xff]
          %v945 = vld [vmem:[%s832 + $0x62] sm:$0xff]
          %v946 = vld [vmem:[%s832 + $0x6a] sm:$0xff]
          %v947 = vld [vmem:[%s832 + $0x7a] sm:$0xff]
          %v948 = vld [vmem:[%s832 + $0x82] sm:$0xff]
          %v949 = vld [vmem:[%s832 + $0x92] sm:$0xff]
          %v950 = vld [vmem:[%s832 + $0x9a] sm:$0xff]
          %v951 = vld [vmem:[%s832 + $0xaa] sm:$0xff]
          %v952 = vld [vmem:[%s832 + $0xb2] sm:$0xff]
          %v953 = vlaneseq
          %v954 = vshrl.u32 %v953, 7
          %v955 = vsub.s32 0, %v954
          %v956 = vrot.slane %v812, %v955
          %v957 = vmul.f32 %v937, %v956
          %v958 = vmul.f32 %v938, %v956
          %v959 = vmul.f32 %v939, %v956
          %v960 = vmul.f32 %v940, %v956
          %v961 = vmul.f32 %v941, %v956
          %v962 = vmul.f32 %v942, %v956
          %v963 = vmul.f32 %v943, %v956
          %v964 = vmul.f32 %v944, %v956
          %v965 = vmul.f32 %v945, %v956
          %v966 = vmul.f32 %v946, %v956
          %v967 = vmul.f32 %v947, %v956
          %v968 = vmul.f32 %v948, %v956
          %v969 = vmul.f32 %v949, %v956
          %v970 = vmul.f32 %v950, %v956
          %v971 = vmul.f32 %v951, %v956
          %v972 = vmul.f32 %v952, %v956
          %v973 = vadd.f32 %v921, %v957
          %v974 = vadd.f32 %v922, %v958
          %v975 = vadd.f32 %v923, %v959
          %v976 = vadd.f32 %v924, %v960
          %v977 = vadd.f32 %v925, %v961
          %v978 = vadd.f32 %v926, %v962
          %v979 = vadd.f32 %v927, %v963
          %v980 = vadd.f32 %v928, %v964
          %v981 = vadd.f32 %v929, %v965
          %v982 = vadd.f32 %v930, %v966
          %v983 = vadd.f32 %v931, %v967
          %v984 = vadd.f32 %v932, %v968
          %v985 = vadd.f32 %v933, %v969
          %v986 = vadd.f32 %v934, %v970
          %v987 = vadd.f32 %v935, %v971
          %v988 = vadd.f32 %v936, %v972
          %s989 = sadd.s32 %s828, 1
          %s990 = smul.u32 %s989, 24
          %s991 = sadd.s32 %s990, %s830
          %s992 = scalar_lea.vmem [#allocation2], %s991
          %v993 = vld [vmem:[%s992] sm:$0xff]
          %v994 = vld [vmem:[%s992 + $0x8] sm:$0xff]
          %v995 = vld [vmem:[%s992 + $0x18] sm:$0xff]
          %v996 = vld [vmem:[%s992 + $0x20] sm:$0xff]
          %v997 = vld [vmem:[%s992 + $0x30] sm:$0xff]
          %v998 = vld [vmem:[%s992 + $0x38] sm:$0xff]
          %v999 = vld [vmem:[%s992 + $0x48] sm:$0xff]
          %v1000 = vld [vmem:[%s992 + $0x50] sm:$0xff]
          %v1001 = vld [vmem:[%s992 + $0x60] sm:$0xff]
          %v1002 = vld [vmem:[%s992 + $0x68] sm:$0xff]
          %v1003 = vld [vmem:[%s992 + $0x78] sm:$0xff]
          %v1004 = vld [vmem:[%s992 + $0x80] sm:$0xff]
          %v1005 = vld [vmem:[%s992 + $0x90] sm:$0xff]
          %v1006 = vld [vmem:[%s992 + $0x98] sm:$0xff]
          %v1007 = vld [vmem:[%s992 + $0xa8] sm:$0xff]
          %v1008 = vld [vmem:[%s992 + $0xb0] sm:$0xff]
          %v1009 = vlaneseq
          %v1010 = vshrl.u32 %v1009, 7
          %v1011 = vsub.s32 0, %v1010
          %v1012 = vrot.slane %v814, %v1011
          %v1013 = vmul.f32 %v993, %v1012
          %v1014 = vmul.f32 %v994, %v1012
          %v1015 = vmul.f32 %v995, %v1012
          %v1016 = vmul.f32 %v996, %v1012
          %v1017 = vmul.f32 %v997, %v1012
          %v1018 = vmul.f32 %v998, %v1012
          %v1019 = vmul.f32 %v999, %v1012
          %v1020 = vmul.f32 %v1000, %v1012
          %v1021 = vmul.f32 %v1001, %v1012
          %v1022 = vmul.f32 %v1002, %v1012
          %v1023 = vmul.f32 %v1003, %v1012
          %v1024 = vmul.f32 %v1004, %v1012
          %v1025 = vmul.f32 %v1005, %v1012
          %v1026 = vmul.f32 %v1006, %v1012
          %v1027 = vmul.f32 %v1007, %v1012
          %v1028 = vmul.f32 %v1008, %v1012
          %v1029 = vadd.f32 %v973, %v1013
          %v1030 = vadd.f32 %v974, %v1014
          %v1031 = vadd.f32 %v975, %v1015
          %v1032 = vadd.f32 %v976, %v1016
          %v1033 = vadd.f32 %v977, %v1017
          %v1034 = vadd.f32 %v978, %v1018
          %v1035 = vadd.f32 %v979, %v1019
          %v1036 = vadd.f32 %v980, %v1020
          %v1037 = vadd.f32 %v981, %v1021
          %v1038 = vadd.f32 %v982, %v1022
          %v1039 = vadd.f32 %v983, %v1023
          %v1040 = vadd.f32 %v984, %v1024
          %v1041 = vadd.f32 %v985, %v1025
          %v1042 = vadd.f32 %v986, %v1026
          %v1043 = vadd.f32 %v987, %v1027
          %v1044 = vadd.f32 %v988, %v1028
          %v1045 = vld [vmem:[%s992 + $0x1] sm:$0xff]
          %v1046 = vld [vmem:[%s992 + $0x9] sm:$0xff]
          %v1047 = vld [vmem:[%s992 + $0x19] sm:$0xff]
          %v1048 = vld [vmem:[%s992 + $0x21] sm:$0xff]
          %v1049 = vld [vmem:[%s992 + $0x31] sm:$0xff]
          %v1050 = vld [vmem:[%s992 + $0x39] sm:$0xff]
          %v1051 = vld [vmem:[%s992 + $0x49] sm:$0xff]
          %v1052 = vld [vmem:[%s992 + $0x51] sm:$0xff]
          %v1053 = vld [vmem:[%s992 + $0x61] sm:$0xff]
          %v1054 = vld [vmem:[%s992 + $0x69] sm:$0xff]
          %v1055 = vld [vmem:[%s992 + $0x79] sm:$0xff]
          %v1056 = vld [vmem:[%s992 + $0x81] sm:$0xff]
          %v1057 = vld [vmem:[%s992 + $0x91] sm:$0xff]
          %v1058 = vld [vmem:[%s992 + $0x99] sm:$0xff]
          %v1059 = vld [vmem:[%s992 + $0xa9] sm:$0xff]
          %v1060 = vld [vmem:[%s992 + $0xb1] sm:$0xff]
          %v1061 = vlaneseq
          %v1062 = vshrl.u32 %v1061, 7
          %v1063 = vsub.s32 0, %v1062
          %v1064 = vrot.slane %v815, %v1063
          %v1065 = vmul.f32 %v1045, %v1064
          %v1066 = vmul.f32 %v1046, %v1064
          %v1067 = vmul.f32 %v1047, %v1064
          %v1068 = vmul.f32 %v1048, %v1064
          %v1069 = vmul.f32 %v1049, %v1064
          %v1070 = vmul.f32 %v1050, %v1064
          %v1071 = vmul.f32 %v1051, %v1064
          %v1072 = vmul.f32 %v1052, %v1064
          %v1073 = vmul.f32 %v1053, %v1064
          %v1074 = vmul.f32 %v1054, %v1064
          %v1075 = vmul.f32 %v1055, %v1064
          %v1076 = vmul.f32 %v1056, %v1064
          %v1077 = vmul.f32 %v1057, %v1064
          %v1078 = vmul.f32 %v1058, %v1064
          %v1079 = vmul.f32 %v1059, %v1064
          %v1080 = vmul.f32 %v1060, %v1064
          %v1081 = vadd.f32 %v1029, %v1065
          %v1082 = vadd.f32 %v1030, %v1066
          %v1083 = vadd.f32 %v1031, %v1067
          %v1084 = vadd.f32 %v1032, %v1068
          %v1085 = vadd.f32 %v1033, %v1069
          %v1086 = vadd.f32 %v1034, %v1070
          %v1087 = vadd.f32 %v1035, %v1071
          %v1088 = vadd.f32 %v1036, %v1072
          %v1089 = vadd.f32 %v1037, %v1073
          %v1090 = vadd.f32 %v1038, %v1074
          %v1091 = vadd.f32 %v1039, %v1075
          %v1092 = vadd.f32 %v1040, %v1076
          %v1093 = vadd.f32 %v1041, %v1077
          %v1094 = vadd.f32 %v1042, %v1078
          %v1095 = vadd.f32 %v1043, %v1079
          %v1096 = vadd.f32 %v1044, %v1080
          %v1097 = vld [vmem:[%s992 + $0x2] sm:$0xff]
          %v1098 = vld [vmem:[%s992 + $0xa] sm:$0xff]
          %v1099 = vld [vmem:[%s992 + $0x1a] sm:$0xff]
          %v1100 = vld [vmem:[%s992 + $0x22] sm:$0xff]
          %v1101 = vld [vmem:[%s992 + $0x32] sm:$0xff]
          %v1102 = vld [vmem:[%s992 + $0x3a] sm:$0xff]
          %v1103 = vld [vmem:[%s992 + $0x4a] sm:$0xff]
          %v1104 = vld [vmem:[%s992 + $0x52] sm:$0xff]
          %v1105 = vld [vmem:[%s992 + $0x62] sm:$0xff]
          %v1106 = vld [vmem:[%s992 + $0x6a] sm:$0xff]
          %v1107 = vld [vmem:[%s992 + $0x7a] sm:$0xff]
          %v1108 = vld [vmem:[%s992 + $0x82] sm:$0xff]
          %v1109 = vld [vmem:[%s992 + $0x92] sm:$0xff]
          %v1110 = vld [vmem:[%s992 + $0x9a] sm:$0xff]
          %v1111 = vld [vmem:[%s992 + $0xaa] sm:$0xff]
          %v1112 = vld [vmem:[%s992 + $0xb2] sm:$0xff]
          %v1113 = vlaneseq
          %v1114 = vshrl.u32 %v1113, 7
          %v1115 = vsub.s32 0, %v1114
          %v1116 = vrot.slane %v816, %v1115
          %v1117 = vmul.f32 %v1097, %v1116
          %v1118 = vmul.f32 %v1098, %v1116
          %v1119 = vmul.f32 %v1099, %v1116
          %v1120 = vmul.f32 %v1100, %v1116
          %v1121 = vmul.f32 %v1101, %v1116
          %v1122 = vmul.f32 %v1102, %v1116
          %v1123 = vmul.f32 %v1103, %v1116
          %v1124 = vmul.f32 %v1104, %v1116
          %v1125 = vmul.f32 %v1105, %v1116
          %v1126 = vmul.f32 %v1106, %v1116
          %v1127 = vmul.f32 %v1107, %v1116
          %v1128 = vmul.f32 %v1108, %v1116
          %v1129 = vmul.f32 %v1109, %v1116
          %v1130 = vmul.f32 %v1110, %v1116
          %v1131 = vmul.f32 %v1111, %v1116
          %v1132 = vmul.f32 %v1112, %v1116
          %v1133 = vadd.f32 %v1081, %v1117
          %v1134 = vadd.f32 %v1082, %v1118
          %v1135 = vadd.f32 %v1083, %v1119
          %v1136 = vadd.f32 %v1084, %v1120
          %v1137 = vadd.f32 %v1085, %v1121
          %v1138 = vadd.f32 %v1086, %v1122
          %v1139 = vadd.f32 %v1087, %v1123
          %v1140 = vadd.f32 %v1088, %v1124
          %v1141 = vadd.f32 %v1089, %v1125
          %v1142 = vadd.f32 %v1090, %v1126
          %v1143 = vadd.f32 %v1091, %v1127
          %v1144 = vadd.f32 %v1092, %v1128
          %v1145 = vadd.f32 %v1093, %v1129
          %v1146 = vadd.f32 %v1094, %v1130
          %v1147 = vadd.f32 %v1095, %v1131
          %v1148 = vadd.f32 %v1096, %v1132
          %s1149 = sadd.s32 %s828, 2
          %s1150 = smul.u32 %s1149, 24
          %s1151 = sadd.s32 %s1150, %s830
          %s1152 = scalar_lea.vmem [#allocation2], %s1151
          %v1153 = vld [vmem:[%s1152] sm:$0xff]
          %v1154 = vld [vmem:[%s1152 + $0x8] sm:$0xff]
          %v1155 = vld [vmem:[%s1152 + $0x18] sm:$0xff]
          %v1156 = vld [vmem:[%s1152 + $0x20] sm:$0xff]
          %v1157 = vld [vmem:[%s1152 + $0x30] sm:$0xff]
          %v1158 = vld [vmem:[%s1152 + $0x38] sm:$0xff]
          %v1159 = vld [vmem:[%s1152 + $0x48] sm:$0xff]
          %v1160 = vld [vmem:[%s1152 + $0x50] sm:$0xff]
          %v1161 = vld [vmem:[%s1152 + $0x60] sm:$0xff]
          %v1162 = vld [vmem:[%s1152 + $0x68] sm:$0xff]
          %v1163 = vld [vmem:[%s1152 + $0x78] sm:$0xff]
          %v1164 = vld [vmem:[%s1152 + $0x80] sm:$0xff]
          %v1165 = vld [vmem:[%s1152 + $0x90] sm:$0xff]
          %v1166 = vld [vmem:[%s1152 + $0x98] sm:$0xff]
          %v1167 = vld [vmem:[%s1152 + $0xa8] sm:$0xff]
          %v1168 = vld [vmem:[%s1152 + $0xb0] sm:$0xff]
          %v1169 = vlaneseq
          %v1170 = vshrl.u32 %v1169, 7
          %v1171 = vsub.s32 0, %v1170
          %v1172 = vrot.slane %v818, %v1171
          %v1173 = vmul.f32 %v1153, %v1172
          %v1174 = vmul.f32 %v1154, %v1172
          %v1175 = vmul.f32 %v1155, %v1172
          %v1176 = vmul.f32 %v1156, %v1172
          %v1177 = vmul.f32 %v1157, %v1172
          %v1178 = vmul.f32 %v1158, %v1172
          %v1179 = vmul.f32 %v1159, %v1172
          %v1180 = vmul.f32 %v1160, %v1172
          %v1181 = vmul.f32 %v1161, %v1172
          %v1182 = vmul.f32 %v1162, %v1172
          %v1183 = vmul.f32 %v1163, %v1172
          %v1184 = vmul.f32 %v1164, %v1172
          %v1185 = vmul.f32 %v1165, %v1172
          %v1186 = vmul.f32 %v1166, %v1172
          %v1187 = vmul.f32 %v1167, %v1172
          %v1188 = vmul.f32 %v1168, %v1172
          %v1189 = vadd.f32 %v1133, %v1173
          %v1190 = vadd.f32 %v1134, %v1174
          %v1191 = vadd.f32 %v1135, %v1175
          %v1192 = vadd.f32 %v1136, %v1176
          %v1193 = vadd.f32 %v1137, %v1177
          %v1194 = vadd.f32 %v1138, %v1178
          %v1195 = vadd.f32 %v1139, %v1179
          %v1196 = vadd.f32 %v1140, %v1180
          %v1197 = vadd.f32 %v1141, %v1181
          %v1198 = vadd.f32 %v1142, %v1182
          %v1199 = vadd.f32 %v1143, %v1183
          %v1200 = vadd.f32 %v1144, %v1184
          %v1201 = vadd.f32 %v1145, %v1185
          %v1202 = vadd.f32 %v1146, %v1186
          %v1203 = vadd.f32 %v1147, %v1187
          %v1204 = vadd.f32 %v1148, %v1188
          %v1205 = vld [vmem:[%s1152 + $0x1] sm:$0xff]
          %v1206 = vld [vmem:[%s1152 + $0x9] sm:$0xff]
          %v1207 = vld [vmem:[%s1152 + $0x19] sm:$0xff]
          %v1208 = vld [vmem:[%s1152 + $0x21] sm:$0xff]
          %v1209 = vld [vmem:[%s1152 + $0x31] sm:$0xff]
          %v1210 = vld [vmem:[%s1152 + $0x39] sm:$0xff]
          %v1211 = vld [vmem:[%s1152 + $0x49] sm:$0xff]
          %v1212 = vld [vmem:[%s1152 + $0x51] sm:$0xff]
          %v1213 = vld [vmem:[%s1152 + $0x61] sm:$0xff]
          %v1214 = vld [vmem:[%s1152 + $0x69] sm:$0xff]
          %v1215 = vld [vmem:[%s1152 + $0x79] sm:$0xff]
          %v1216 = vld [vmem:[%s1152 + $0x81] sm:$0xff]
          %v1217 = vld [vmem:[%s1152 + $0x91] sm:$0xff]
          %v1218 = vld [vmem:[%s1152 + $0x99] sm:$0xff]
          %v1219 = vld [vmem:[%s1152 + $0xa9] sm:$0xff]
          %v1220 = vld [vmem:[%s1152 + $0xb1] sm:$0xff]
          %v1221 = vlaneseq
          %v1222 = vshrl.u32 %v1221, 7
          %v1223 = vsub.s32 0, %v1222
          %v1224 = vrot.slane %v819, %v1223
          %v1225 = vmul.f32 %v1205, %v1224
          %v1226 = vmul.f32 %v1206, %v1224
          %v1227 = vmul.f32 %v1207, %v1224
          %v1228 = vmul.f32 %v1208, %v1224
          %v1229 = vmul.f32 %v1209, %v1224
          %v1230 = vmul.f32 %v1210, %v1224
          %v1231 = vmul.f32 %v1211, %v1224
          %v1232 = vmul.f32 %v1212, %v1224
          %v1233 = vmul.f32 %v1213, %v1224
          %v1234 = vmul.f32 %v1214, %v1224
          %v1235 = vmul.f32 %v1215, %v1224
          %v1236 = vmul.f32 %v1216, %v1224
          %v1237 = vmul.f32 %v1217, %v1224
          %v1238 = vmul.f32 %v1218, %v1224
          %v1239 = vmul.f32 %v1219, %v1224
          %v1240 = vmul.f32 %v1220, %v1224
          %v1241 = vadd.f32 %v1189, %v1225
          %v1242 = vadd.f32 %v1190, %v1226
          %v1243 = vadd.f32 %v1191, %v1227
          %v1244 = vadd.f32 %v1192, %v1228
          %v1245 = vadd.f32 %v1193, %v1229
          %v1246 = vadd.f32 %v1194, %v1230
          %v1247 = vadd.f32 %v1195, %v1231
          %v1248 = vadd.f32 %v1196, %v1232
          %v1249 = vadd.f32 %v1197, %v1233
          %v1250 = vadd.f32 %v1198, %v1234
          %v1251 = vadd.f32 %v1199, %v1235
          %v1252 = vadd.f32 %v1200, %v1236
          %v1253 = vadd.f32 %v1201, %v1237
          %v1254 = vadd.f32 %v1202, %v1238
          %v1255 = vadd.f32 %v1203, %v1239
          %v1256 = vadd.f32 %v1204, %v1240
          %v1257 = vld [vmem:[%s1152 + $0x2] sm:$0xff]
          %v1258 = vld [vmem:[%s1152 + $0xa] sm:$0xff]
          %v1259 = vld [vmem:[%s1152 + $0x1a] sm:$0xff]
          %v1260 = vld [vmem:[%s1152 + $0x22] sm:$0xff]
          %v1261 = vld [vmem:[%s1152 + $0x32] sm:$0xff]
          %v1262 = vld [vmem:[%s1152 + $0x3a] sm:$0xff]
          %v1263 = vld [vmem:[%s1152 + $0x4a] sm:$0xff]
          %v1264 = vld [vmem:[%s1152 + $0x52] sm:$0xff]
          %v1265 = vld [vmem:[%s1152 + $0x62] sm:$0xff]
          %v1266 = vld [vmem:[%s1152 + $0x6a] sm:$0xff]
          %v1267 = vld [vmem:[%s1152 + $0x7a] sm:$0xff]
          %v1268 = vld [vmem:[%s1152 + $0x82] sm:$0xff]
          %v1269 = vld [vmem:[%s1152 + $0x92] sm:$0xff]
          %v1270 = vld [vmem:[%s1152 + $0x9a] sm:$0xff]
          %v1271 = vld [vmem:[%s1152 + $0xaa] sm:$0xff]
          %v1272 = vld [vmem:[%s1152 + $0xb2] sm:$0xff]
          %v1273 = vlaneseq
          %v1274 = vshrl.u32 %v1273, 7
          %v1275 = vsub.s32 0, %v1274
          %v1276 = vrot.slane %v820, %v1275
          %v1277 = vmul.f32 %v1257, %v1276
          %v1278 = vmul.f32 %v1258, %v1276
          %v1279 = vmul.f32 %v1259, %v1276
          %v1280 = vmul.f32 %v1260, %v1276
          %v1281 = vmul.f32 %v1261, %v1276
          %v1282 = vmul.f32 %v1262, %v1276
          %v1283 = vmul.f32 %v1263, %v1276
          %v1284 = vmul.f32 %v1264, %v1276
          %v1285 = vmul.f32 %v1265, %v1276
          %v1286 = vmul.f32 %v1266, %v1276
          %v1287 = vmul.f32 %v1267, %v1276
          %v1288 = vmul.f32 %v1268, %v1276
          %v1289 = vmul.f32 %v1269, %v1276
          %v1290 = vmul.f32 %v1270, %v1276
          %v1291 = vmul.f32 %v1271, %v1276
          %v1292 = vmul.f32 %v1272, %v1276
          %v1293 = vadd.f32 %v1241, %v1277
          %v1294 = vadd.f32 %v1242, %v1278
          %v1295 = vadd.f32 %v1243, %v1279
          %v1296 = vadd.f32 %v1244, %v1280
          %v1297 = vadd.f32 %v1245, %v1281
          %v1298 = vadd.f32 %v1246, %v1282
          %v1299 = vadd.f32 %v1247, %v1283
          %v1300 = vadd.f32 %v1248, %v1284
          %v1301 = vadd.f32 %v1249, %v1285
          %v1302 = vadd.f32 %v1250, %v1286
          %v1303 = vadd.f32 %v1251, %v1287
          %v1304 = vadd.f32 %v1252, %v1288
          %v1305 = vadd.f32 %v1253, %v1289
          %v1306 = vadd.f32 %v1254, %v1290
          %v1307 = vadd.f32 %v1255, %v1291
          %v1308 = vadd.f32 %v1256, %v1292
          %v1309 = vpack.c.bf16 %v1294, %v1293
          %v1310 = vpack.c.bf16 %v1296, %v1295
          %v1311 = vpack.c.bf16 %v1298, %v1297
          %v1312 = vpack.c.bf16 %v1300, %v1299
          %v1313 = vpack.c.bf16 %v1302, %v1301
          %v1314 = vpack.c.bf16 %v1304, %v1303
          %v1315 = vpack.c.bf16 %v1306, %v1305
          %v1316 = vpack.c.bf16 %v1308, %v1307
          %v1317 = vld [vmem:[%s2] sm:$0xf]
          %v1318 = vld [vmem:[%s2 + $0x4] sm:$0xf]
          %v1319 = vld [vmem:[%s2 + $0x8] sm:$0xf]
          %v1320 = vld [vmem:[%s2 + $0xc] sm:$0xf]
          %v1321 = vld [vmem:[%s2 + $0x10] sm:$0xf]
          %v1322 = vld [vmem:[%s2 + $0x14] sm:$0xf]
          %v1323 = vld [vmem:[%s2 + $0x18] sm:$0xf]
          %v1324 = vld [vmem:[%s2 + $0x1c] sm:$0xf]
          %v1325 = vld [vmem:[%s2 + $0x20] sm:$0xf]
          %v1326 = vld [vmem:[%s2 + $0x24] sm:$0xf]
          %v1327 = vld [vmem:[%s2 + $0x28] sm:$0xf]
          %v1328 = vld [vmem:[%s2 + $0x2c] sm:$0xf]
          %v1329 = vld [vmem:[%s2 + $0x30] sm:$0xf]
          %v1330 = vld [vmem:[%s2 + $0x34] sm:$0xf]
          %v1331 = vld [vmem:[%s2 + $0x38] sm:$0xf]
          %v1332 = vld [vmem:[%s2 + $0x3c] sm:$0xf]
          %v1334 = vlaneseq
          %v1335 = vshrl.u32 %v1334, 7
          %v1336 = vsub.s32 0, %v1335
          %v1337 = vrot.slane %v821, %v1336
          %v1355 = vunpack.c.l.b16 %v1317
          %v1356 = vunpack.c.l.b16 %v1318
          %v1357 = vunpack.c.l.b16 %v1319
          %v1358 = vunpack.c.l.b16 %v1320
          %v1359 = vunpack.c.l.b16 %v1321
          %v1360 = vunpack.c.l.b16 %v1322
          %v1361 = vunpack.c.l.b16 %v1323
          %v1362 = vunpack.c.l.b16 %v1324
          %v1363 = vunpack.c.l.b16 %v1325
          %v1364 = vunpack.c.l.b16 %v1326
          %v1365 = vunpack.c.l.b16 %v1327
          %v1366 = vunpack.c.l.b16 %v1328
          %v1367 = vunpack.c.l.b16 %v1329
          %v1368 = vunpack.c.l.b16 %v1330
          %v1369 = vunpack.c.l.b16 %v1331
          %v1370 = vunpack.c.l.b16 %v1332
          %v1371 = vpack.c.b16 %v1356, %v1355
          %v1372 = vpack.c.b16 %v1358, %v1357
          %v1373 = vpack.c.b16 %v1360, %v1359
          %v1374 = vpack.c.b16 %v1362, %v1361
          %v1375 = vpack.c.b16 %v1364, %v1363
          %v1376 = vpack.c.b16 %v1366, %v1365
          %v1377 = vpack.c.b16 %v1368, %v1367
          %v1378 = vpack.c.b16 %v1370, %v1369
          %1387 = vmatprep.subr.bf16.mxu0 0
          %1388 = vmatpush1.bf16.msra.mxu0 %v1371
          %1389 = vmatprep.subr.bf16.mxu0 0
          %1390 = vmatpush1.bf16.msra.mxu0 %v1372
          %1391 = vmatprep.subr.bf16.mxu0 0
          %1392 = vmatpush1.bf16.msra.mxu0 %v1373
          %1393 = vmatprep.subr.bf16.mxu0 0
          %1394 = vmatpush1.bf16.msra.mxu0 %v1374
          %1395 = vmatprep.subr.bf16.mxu0 0
          %1396 = vmatpush1.bf16.msra.mxu0 %v1375
          %1397 = vmatprep.subr.bf16.mxu0 0
          %1398 = vmatpush1.bf16.msra.mxu0 %v1376
          %1399 = vmatprep.subr.bf16.mxu0 0
          %1400 = vmatpush1.bf16.msra.mxu0 %v1377
          %1401 = vmatprep.subr.bf16.mxu0 0
          %1402 = vmatpush1.bf16.msra.mxu0 %v1378
          %1403 = vmatprep.subr.bf16.mxu0 0
          %1404 = vmatpush1.bf16.msra.mxu0 0
          %1405 = vmatprep.subr.bf16.mxu0 0
          %1406 = vmatpush1.bf16.msra.mxu0 0
          %1407 = vmatprep.subr.bf16.mxu0 0
          %1408 = vmatpush1.bf16.msra.mxu0 0
          %1409 = vmatprep.subr.bf16.mxu0 0
          %1410 = vmatpush1.bf16.msra.mxu0 0
          %1411 = vmatprep.subr.bf16.mxu0 0
          %1412 = vmatpush1.bf16.msra.mxu0 0
          %1413 = vmatprep.subr.bf16.mxu0 0
          %1414 = vmatpush1.bf16.msra.mxu0 0
          %1415 = vmatprep.subr.bf16.mxu0 0
          %1416 = vmatpush1.bf16.msra.mxu0 0
          %1417 = vmatprep.subr.bf16.mxu0 0
          %1418 = vmatpush1.bf16.msra.mxu0 0
          %1419 = vmatprep.mubr.bf16.mxu0 0
          %1420 = vmatmul.mubr.bf16.gmra.mrb[0].mxu0 %v1309
          %v1421 = vpop.f32.mrb[0].mxu0
          %v1422 = vadd.f32 %v1337, %v1421
          %v1423 = vpop.f32.mrb[0].mxu0
          %v1424 = vpop.f32.mrb[0].mxu0
          %v1425 = vadd.f32 %v1337, %v1424
          %v1426 = vpop.f32.mrb[0].mxu0
          %1427 = vmatprep.mubr.bf16.mxu0 0
          %1428 = vmatmul.mubr.bf16.gmra.mrb[0].mxu0 %v1310
          %v1429 = vpop.f32.mrb[0].mxu0
          %v1430 = vadd.f32 %v1337, %v1429
          %v1431 = vpop.f32.mrb[0].mxu0
          %v1432 = vpop.f32.mrb[0].mxu0
          %v1433 = vadd.f32 %v1337, %v1432
          %v1434 = vpop.f32.mrb[0].mxu0
          %1435 = vmatprep.mubr.bf16.mxu0 0
          %1436 = vmatmul.mubr.bf16.gmra.mrb[0].mxu0 %v1311
          %v1437 = vpop.f32.mrb[0].mxu0
          %v1438 = vadd.f32 %v1337, %v1437
          %v1439 = vpop.f32.mrb[0].mxu0
          %v1440 = vpop.f32.mrb[0].mxu0
          %v1441 = vadd.f32 %v1337, %v1440
          %v1442 = vpop.f32.mrb[0].mxu0
          %1443 = vmatprep.mubr.bf16.mxu0 0
          %1444 = vmatmul.mubr.bf16.gmra.mrb[0].mxu0 %v1312
          %v1445 = vpop.f32.mrb[0].mxu0
          %v1446 = vadd.f32 %v1337, %v1445
          %v1447 = vpop.f32.mrb[0].mxu0
          %v1448 = vpop.f32.mrb[0].mxu0
          %v1449 = vadd.f32 %v1337, %v1448
          %v1450 = vpop.f32.mrb[0].mxu0
          %1451 = vmatprep.mubr.bf16.mxu0 0
          %1452 = vmatmul.mubr.bf16.gmra.mrb[0].mxu0 %v1313
          %v1453 = vpop.f32.mrb[0].mxu0
          %v1454 = vadd.f32 %v1337, %v1453
          %v1455 = vpop.f32.mrb[0].mxu0
          %v1456 = vpop.f32.mrb[0].mxu0
          %v1457 = vadd.f32 %v1337, %v1456
          %v1458 = vpop.f32.mrb[0].mxu0
          %1459 = vmatprep.mubr.bf16.mxu0 0
          %1460 = vmatmul.mubr.bf16.gmra.mrb[0].mxu0 %v1314
          %v1461 = vpop.f32.mrb[0].mxu0
          %v1462 = vadd.f32 %v1337, %v1461
          %v1463 = vpop.f32.mrb[0].mxu0
          %v1464 = vpop.f32.mrb[0].mxu0
          %v1465 = vadd.f32 %v1337, %v1464
          %v1466 = vpop.f32.mrb[0].mxu0
          %1467 = vmatprep.mubr.bf16.mxu0 0
          %1468 = vmatmul.mubr.bf16.gmra.mrb[0].mxu0 %v1315
          %v1469 = vpop.f32.mrb[0].mxu0
          %v1470 = vadd.f32 %v1337, %v1469
          %v1471 = vpop.f32.mrb[0].mxu0
          %v1472 = vpop.f32.mrb[0].mxu0
          %v1473 = vadd.f32 %v1337, %v1472
          %v1474 = vpop.f32.mrb[0].mxu0
          %1475 = vmatprep.mubr.bf16.mxu0 0
          %1476 = vmatmul.mubr.bf16.gmra.mrb[0].mxu0 %v1316
          %v1477 = vpop.f32.mrb[0].mxu0
          %v1478 = vadd.f32 %v1337, %v1477
          %v1479 = vpop.f32.mrb[0].mxu0
          %v1480 = vpop.f32.mrb[0].mxu0
          %v1481 = vadd.f32 %v1337, %v1480
          %v1482 = vpop.f32.mrb[0].mxu0
          %1483 = vdwg.mxu0
          %v1484 = vadd.f32 %v1422, %v1045
          %v1485 = vadd.f32 %v1425, %v1046
          %v1486 = vadd.f32 %v1430, %v1047
          %v1487 = vadd.f32 %v1433, %v1048
          %v1488 = vadd.f32 %v1438, %v1049
          %v1489 = vadd.f32 %v1441, %v1050
          %v1490 = vadd.f32 %v1446, %v1051
          %v1491 = vadd.f32 %v1449, %v1052
          %v1492 = vadd.f32 %v1454, %v1053
          %v1493 = vadd.f32 %v1457, %v1054
          %v1494 = vadd.f32 %v1462, %v1055
          %v1495 = vadd.f32 %v1465, %v1056
          %v1496 = vadd.f32 %v1470, %v1057
          %v1497 = vadd.f32 %v1473, %v1058
          %v1498 = vadd.f32 %v1478, %v1059
          %v1499 = vadd.f32 %v1481, %v1060
          %v1500 = vmax.f32 %v1484, 0.0
          %v1501 = vmax.f32 %v1485, 0.0
          %v1502 = vmax.f32 %v1486, 0.0
          %v1503 = vmax.f32 %v1487, 0.0
          %v1504 = vmax.f32 %v1488, 0.0
          %v1505 = vmax.f32 %v1489, 0.0
          %v1506 = vmax.f32 %v1490, 0.0
          %v1507 = vmax.f32 %v1491, 0.0
          %v1508 = vmax.f32 %v1492, 0.0
          %v1509 = vmax.f32 %v1493, 0.0
          %v1510 = vmax.f32 %v1494, 0.0
          %v1511 = vmax.f32 %v1495, 0.0
          %v1512 = vmax.f32 %v1496, 0.0
          %v1513 = vmax.f32 %v1497, 0.0
          %v1514 = vmax.f32 %v1498, 0.0
          %v1515 = vmax.f32 %v1499, 0.0
          %s1516 = smul.u32 %s828, 16
          %s1517 = scalar_lea.vmem %s172, %s1516 [#allocation4]
          %1518 = vst [vmem:[%s1517] sm:$0xff] %v1500
          %1519 = vst [vmem:[%s1517 + $0x8] sm:$0xff] %v1501
          %1520 = vst [vmem:[%s1517 + $0x10] sm:$0xff] %v1502
          %1521 = vst [vmem:[%s1517 + $0x18] sm:$0xff] %v1503
          %1522 = vst [vmem:[%s1517 + $0x20] sm:$0xff] %v1504
          %1523 = vst [vmem:[%s1517 + $0x28] sm:$0xff] %v1505
          %1524 = vst [vmem:[%s1517 + $0x30] sm:$0xff] %v1506
          %1525 = vst [vmem:[%s1517 + $0x38] sm:$0xff] %v1507
          %1526 = vst [vmem:[%s1517 + $0x40] sm:$0xff] %v1508
          %1527 = vst [vmem:[%s1517 + $0x48] sm:$0xff] %v1509
          %1528 = vst [vmem:[%s1517 + $0x50] sm:$0xff] %v1510
          %1529 = vst [vmem:[%s1517 + $0x58] sm:$0xff] %v1511
          %1530 = vst [vmem:[%s1517 + $0x60] sm:$0xff] %v1512
          %1531 = vst [vmem:[%s1517 + $0x68] sm:$0xff] %v1513
          %1532 = vst [vmem:[%s1517 + $0x70] sm:$0xff] %v1514
          %1533 = vst [vmem:[%s1517 + $0x78] sm:$0xff] %v1515
        $region160: #{tpu_custom_call.1} parent=31 // loop_footer
          %s827 = sadd.s32 1, %s823
        $region161: #{tpu_custom_call.1} parent=31 // loop_footer_branch
          %822 = sbr.rel target = $region157
        $region162: #{tpu_custom_call.1} parent=31 // loop_exit
          _
        %s1534 = sand.u32 %s112, 1
        %s1535 = scalar_lea.sflag [#allocation5], %s1534
        %s1536 = sand.u32 %s112, 1
        %s1537 = smul.addr %s1536, 256
        %s1538 = scalar_lea.vmem [#allocation4], %s1537
        // Predicated region
        $region163: #{tpu_custom_call.1} parent=31 // pred_check
          %p1539 = pneg %p122
        $region164: #{tpu_custom_call.1} parent=31 // pred_check_branch
          %1541 = sbr.rel (%p1539) target = $region166
        $region165: #{tpu_custom_call.1} parent=31 // pred_region
          %s1542 = sadd.s32 %s23, %s24
          %s1543 = smul.u32 16, %s25
          %s1545 = ssub.s32 4096, 4096
          %1546 = vsyncadd %s1535, %s1545
          %s1547 = smul.addr %s1543, 2
          %s1548 = smul.addr %s1542, 32
          %s1549 = sadd.s32 %s1547, %s1548
          %s1550 = smul.addr %s1549, 128
          %s1551 = scalar_lea.hbm %s4, %s1550
          %s1552 = sshll.u32 %s1538, 4
          %s1553 = int_to_ptr.vmem [resolvable:$true] %s1552
          %1558 = dma.vmem_to_hbm [thread:$0]  %s1553, 4096, %s1551, %s1535, 128, 128, 8
        $region166: #{tpu_custom_call.1} parent=31 // pred_fallthru
          _
      $region32: #{tpu_custom_call.1} parent=5 // pred_fallthru
        _
      %p1559 = scmp.le.s32.totalorder 2, %s13
      // Predicated region
      $region167: #{tpu_custom_call.1} parent=5 // pred_check
        %p1560 = pneg %p1559
      $region168: #{tpu_custom_call.1} parent=5 // pred_check_branch
        %1562 = sbr.rel (%p1560) target = $region170
      $region169: #{tpu_custom_call.1} parent=5 // pred_region
        %s1563 = ssub.s32 %s13, 2
        // Predicated region
        $region171: #{tpu_custom_call.1} parent=169 // pred_check
          %p1564 = pneg %p128
        $region172: #{tpu_custom_call.1} parent=169 // pred_check_branch
          %1566 = sbr.rel (%p1564) target = $region174
        $region173: #{tpu_custom_call.1} parent=169 // pred_region
          %s1567 = sand.u32 %s113, 1
          %s1568 = scalar_lea.sflag [#allocation5], %s1567
          %s1569 = sand.u32 %s113, 1
          %s1570 = smul.addr %s1569, 256
          %s1571 = scalar_lea.vmem [#allocation4], %s1570
          %1572 = dma.done %s1568, 4096
        $region174: #{tpu_custom_call.1} parent=169 // pred_fallthru
          _
      $region170: #{tpu_custom_call.1} parent=5 // pred_fallthru
        _
    $region6: #{tpu_custom_call.1} parent=1 // loop_footer
      %s17 = sadd.s32 1, %s13
    $region7: #{tpu_custom_call.1} parent=1 // loop_footer_branch
      %12 = sbr.rel target = $region3
    $region8: #{tpu_custom_call.1} parent=1 // loop_exit
      _
    %1573 = vsyncpa [#allocation5], 1
    %s1574 = scalar_lea.sflag [#allocation5], 1
    %1575 = vsyncpa %s1574, 1
  %1576 = vsyncmov [#allocation3]
  %s1577 = vpop.sfrf %1576
  %p1578 = scmp.eq.s32.totalorder %s1577, 0
  %p1579 = pneg %p1578
  %1581 = shalt.err (%p1579)
  %s1582 = scalar_lea.sflag [#allocation3], 1
  %1583 = vsyncmov %s1582
  %s1584 = vpop.sfrf %1583
  %p1585 = scmp.eq.s32.totalorder %s1584, 0
  %p1586 = pneg %p1585
  %1588 = shalt.err (%p1586)

</llo_original>
